<compile_context>
chip_gen: v5e
topology: v5e:2x2
jax: 0.10.0
libtpu: 0.0.40
codegen_flags: <defaults>
</compile_context>

<pallas_src>
import functools

import jax
import jax.numpy as jnp
from jax import lax
from jax.experimental import pallas as pl
from jax.experimental.pallas import tpu as pltpu


# -----------------------------------------------------------------------------
# Host-side constant folding (called once, outside the per-call path).
# -----------------------------------------------------------------------------
def _lane_conv_matrix(taps, W, C, dilation):
    """(W*C, W*C) matrix A such that (row @ A) == depthwise 1x3 conv along W (zero pad).

    A row of the (rows, W*C) slab holds element (w, c) at lane w*C + c.
    taps: (C, 3) per-channel taps (PyTorch weight[c, 0, 0, k]).
    """
    rows, cols, ci, ki = [], [], [], []
    for k in range(3):
        off = (k - 1) * dilation
        for w_out in range(W):
            w_in = w_out + off
            if 0 <= w_in < W:
                for c in range(C):
                    rows.append(w_in * C + c)
                    cols.append(w_out * C + c)
                    ci.append(c)
                    ki.append(k)
    vals = taps[jnp.asarray(ci), jnp.asarray(ki)]
    A = jnp.zeros((W * C, W * C), jnp.float32)
    return A.at[jnp.asarray(rows), jnp.asarray(cols)].set(vals)


def prepare_constants(params, H, W, C, block_images, eps=1e-5,
                      matmul_dtype=jnp.bfloat16):
    """Fold conv weights, biases and the shared eval-mode BN into kernel operands."""
    WC = W * C
    B = block_images
    tile = lambda v: jnp.tile(v, W)                       # per-channel -> per-lane

    # Eval-mode BN folded to per-channel scale s / shift f.
    s = params["gamma"] / jnp.sqrt(params["var"] + eps)
    f = params["beta"] - params["mean"] * s
    s_t, f_t = tile(s), tile(f)

    # Raw lane matrices for the W-direction convs and the 1x1 conv.
    A1 = _lane_conv_matrix(params["w0h"], W, C, 1)                       # conv0h
    A3 = _lane_conv_matrix(params["wsh"], W, C, 2)                       # conv_spatial_h
    A5 = jnp.kron(jnp.eye(W, dtype=jnp.float32),
                  params["w1"].T.astype(jnp.float32))                    # conv1 (1x1)

    # BN of the *preceding* stage folded into the linear stage (v -> s*v + f):
    # scale folds into the matrix rows, shift folds into the bias row.
    aw = jnp.stack([A1, s_t[:, None] * A3, s_t[:, None] * A5]).astype(matmul_dtype)
    brow = jnp.stack([
        tile(params["b0h"]),
        jnp.dot(f_t, A3, precision="highest") + tile(params["bsh"]),
        jnp.dot(f_t, A5, precision="highest") + tile(params["b1"]),
    ]).astype(jnp.float32)                                               # (3, WC)

    # H-direction convs: block-diagonal (B*H, B*H) row-shift matrices (d=1, d=2),
    # zero padding at image boundaries baked in (no bleed across stacked images).
    def shift_mat(d, sign):
        return jnp.kron(jnp.eye(B, dtype=jnp.float32),
                        jnp.eye(H, k=sign * d, dtype=jnp.float32))
    sh = jnp.stack([shift_mat(1, -1), shift_mat(1, +1),
                    shift_mat(2, -1), shift_mat(2, +1)]).astype(matmul_dtype)

    # Per-lane vertical taps with the preceding BN scale folded in.
    wv = jnp.stack([tile(s * params["w0v"][:, k]) for k in range(3)] +
                   [tile(s * params["wsv"][:, k]) for k in range(3)]
                   ).astype(jnp.float32)                                 # (6, WC)

    # Bias *fields* for the vertical stages: conv bias + preceding BN shift pushed
    # through the zero-padded shift structure (row-dependent near image edges).
    def bias_field(taps, b, d):
        h = jnp.arange(H)[:, None].astype(jnp.float32)
        lo = (h >= d).astype(jnp.float32)          # h-d tap in bounds
        hi = (h < H - d).astype(jnp.float32)       # h+d tap in bounds
        fld = (lo * (f_t * tile(taps[:, 0]))
               + (f_t * tile(taps[:, 1]))
               + hi * (f_t * tile(taps[:, 2]))
               + tile(b))
        return jnp.tile(fld, (B, 1))               # (B*H, WC), periodic per image

    bfield = jnp.stack([bias_field(params["w0v"], params["b0v"], 1),
                        bias_field(params["wsv"], params["bsv"], 2)]
                       ).astype(jnp.float32)                             # (2, B*H, WC)

    bn = jnp.stack([s_t, f_t]).astype(jnp.float32)                       # (2, WC)
    return dict(aw=aw, sh=sh, wv=wv, brow=brow, bfield=bfield, bn=bn)


# -----------------------------------------------------------------------------
# Fused kernel: B images per grid step, everything stays in VMEM.
# -----------------------------------------------------------------------------
def _lska7_kernel(x_ref, aw_ref, sh_ref, wv_ref, brow_ref, bfield_ref, bn_ref, o_ref):
    mdt = aw_ref.dtype                          # matmul operand dtype (bf16 or f32)
    x = x_ref[...].astype(jnp.float32)          # (B*H, W*C); also the gate input u
    scale = bn_ref[0:1, :]
    shift = bn_ref[1:2, :]

    def conv_w(v, i):
        # W-direction depthwise conv / 1x1 conv: one full (BH,WC)@(WC,WC) MXU pass.
        return (jnp.dot(v.astype(mdt), aw_ref[i], preferred_element_type=jnp.float32)
                + brow_ref[i:i + 1, :])

    def conv_h(v, si, wi, bi):
        # H-direction depthwise conv: 2 block-diag (BH,BH) shift matmuls + center tap.
        vb = v.astype(mdt)
        acc = bfield_ref[bi] + v * wv_ref[wi + 1:wi + 2, :]
        acc = acc + (jnp.dot(sh_ref[si], vb, preferred_element_type=jnp.float32)
                     * wv_ref[wi:wi + 1, :])
        acc = acc + (jnp.dot(sh_ref[si + 1], vb, preferred_element_type=jnp.float32)
                     * wv_ref[wi + 2:wi + 3, :])
        return acc

    relu = lambda v: jnp.maximum(v, 0.0)

    t = conv_w(x, 0)                  # conv0h (+ bias)
    t = conv_h(relu(t), 0, 0, 0)      # ReLU -> [BN folded] conv0v
    t = conv_w(relu(t), 1)            # ReLU -> [BN folded] conv_spatial_h
    t = conv_h(relu(t), 2, 3, 1)      # ReLU -> [BN folded] conv_spatial_v
    t = conv_w(relu(t), 2)            # ReLU -> [BN folded] conv1 (1x1)
    a = relu(t) * scale + shift       # explicit ReLU + BN
    y = relu(x * a) * scale + shift   # u * attn gate, ReLU + BN
    o_ref[...] = y.astype(o_ref.dtype)


# -----------------------------------------------------------------------------
# Wrapper.
# -----------------------------------------------------------------------------
def pick_block_images(N, H, target_rows=128):
    """Images stacked per grid step so each matmul LHS has ~target_rows sublanes."""
    B = max(1, min(N, max(1, target_rows // H)))
    if N > 1:
        B = min(B, pl.cdiv(N, 2))     # keep >= 2 grid steps (v7x has 2 TensorCores)
    return B


def lska7_forward(x_nchw, consts, *, block_images):
    """Forward pass matching LSKA7 (eval-mode BatchNorm). Wrap in jax.jit."""
    N, C, H, W = x_nchw.shape
    WC = W * C
    B = block_images
    BH = B * H
    assert consts["sh"].shape[-1] == BH, "consts prepared for a different block_images"
    assert BH % 8 == 0, "block_images * H must be a multiple of 8 (sublane tiling)"

    # NCHW -> lane-dense slab (N*H, W*C): element (n,h,w,c) -> row n*H+h, lane w*C+c.
    x = jnp.transpose(x_nchw, (0, 2, 3, 1)).reshape(N * H, WC).astype(jnp.float32)

    n_blocks = pl.cdiv(N, B)
    n_pad = n_blocks * B
    if n_pad != N:
        x = jnp.pad(x, ((0, (n_pad - N) * H), (0, 0)))

    out = pl.pallas_call(
        _lska7_kernel,
        out_shape=jax.ShapeDtypeStruct((n_pad * H, WC), x_nchw.dtype),
        grid_spec=pltpu.PrefetchScalarGridSpec(
            num_scalar_prefetch=0,
            grid=(n_blocks,),
            in_specs=[
                pl.BlockSpec((BH, WC), lambda n: (n, 0)),
                # Constant operands: constant index maps -> DMA'd only on step 0.
                # (pl.Buffered(1) would also drop their double buffers, but the waste
                #  is <1 MiB here so it is not load-bearing.)
                pl.BlockSpec(consts["aw"].shape, lambda n: (0, 0, 0)),
                pl.BlockSpec(consts["sh"].shape, lambda n: (0, 0, 0)),
                pl.BlockSpec(consts["wv"].shape, lambda n: (0, 0)),
                pl.BlockSpec(consts["brow"].shape, lambda n: (0, 0)),
                pl.BlockSpec(consts["bfield"].shape, lambda n: (0, 0, 0)),
                pl.BlockSpec(consts["bn"].shape, lambda n: (0, 0)),
            ],
            out_specs=pl.BlockSpec((BH, WC), lambda n: (n, 0)),
        ),
        compiler_params=pltpu.CompilerParams(
            dimension_semantics=("parallel",),
            vmem_limit_bytes=32 * 1024 * 1024,
        ),
    )(x, consts["aw"], consts["sh"], consts["wv"],
      consts["brow"], consts["bfield"], consts["bn"])

    out = out[: N * H].reshape(N, H, W, C)
    return jnp.transpose(out, (0, 3, 1, 2))


# -----------------------------------------------------------------------------
# Pure-JAX reference (lax.conv_general_dilated) for verification.
# -----------------------------------------------------------------------------
def _reference_lska7(x_nchw, params, eps=1e-5):
    x = jnp.transpose(x_nchw, (0, 2, 3, 1))   # NHWC
    C = x.shape[-1]
    scale = params["gamma"] / jnp.sqrt(params["var"] + eps)
    shift = params["beta"] - params["mean"] * scale

    def relu_bn(v):
        return jnp.maximum(v, 0.0) * scale + shift

    def dw_h(v, wt, b, dil):
        w = wt.T.reshape(1, 3, 1, C)
        y = lax.conv_general_dilated(
            v, w, (1, 1), ((0, 0), (dil, dil)), rhs_dilation=(1, dil),
            dimension_numbers=("NHWC", "HWIO", "NHWC"), feature_group_count=C)
        return y + b

    def dw_v(v, wt, b, dil):
        w = wt.T.reshape(3, 1, 1, C)
        y = lax.conv_general_dilated(
            v, w, (1, 1), ((dil, dil), (0, 0)), rhs_dilation=(dil, 1),
            dimension_numbers=("NHWC", "HWIO", "NHWC"), feature_group_count=C)
        return y + b

    attn = relu_bn(dw_h(x, params["w0h"], params["b0h"], 1))
    attn = relu_bn(dw_v(attn, params["w0v"], params["b0v"], 1))
    attn = relu_bn(dw_h(attn, params["wsh"], params["bsh"], 2))
    attn = relu_bn(dw_v(attn, params["wsv"], params["bsv"], 2))
    w1 = params["w1"].T.reshape(1, 1, C, C)
    attn = lax.conv_general_dilated(
        attn, w1, (1, 1), ((0, 0), (0, 0)),
        dimension_numbers=("NHWC", "HWIO", "NHWC")) + params["b1"]
    attn = relu_bn(attn)
    y = relu_bn(x * attn)
    return jnp.transpose(y, (0, 3, 1, 2))


def make_params(key, C):
    """Deterministic synthetic parameters (PyTorch layouts, dim == in_channels)."""
    ks = jax.random.split(key, 14)
    return {
        "w0h": 0.3 * jax.random.normal(ks[0], (C, 3), jnp.float32),
        "b0h": 0.1 * jax.random.normal(ks[1], (C,), jnp.float32),
        "w0v": 0.3 * jax.random.normal(ks[2], (C, 3), jnp.float32),
        "b0v": 0.1 * jax.random.normal(ks[3], (C,), jnp.float32),
        "wsh": 0.3 * jax.random.normal(ks[4], (C, 3), jnp.float32),
        "bsh": 0.1 * jax.random.normal(ks[5], (C,), jnp.float32),
        "wsv": 0.3 * jax.random.normal(ks[6], (C, 3), jnp.float32),
        "bsv": 0.1 * jax.random.normal(ks[7], (C,), jnp.float32),
        "w1": 0.3 * jax.random.normal(ks[8], (C, C), jnp.float32),
        "b1": 0.1 * jax.random.normal(ks[9], (C,), jnp.float32),
        "gamma": 1.0 + 0.1 * jax.random.normal(ks[10], (C,), jnp.float32),
        "beta": 0.1 * jax.random.normal(ks[11], (C,), jnp.float32),
        "mean": 0.05 * jax.random.normal(ks[12], (C,), jnp.float32),
        "var": 0.5 + jnp.abs(jax.random.normal(ks[13], (C,), jnp.float32)),
    }


if __name__ == "__main__":
    key = jax.random.PRNGKey(0)
    k_x, k_p = jax.random.split(key)

    # dim must equal in_channels (=8) for the u * attn gate; W*C = 128 lanes.
    batch, channels, H, W = 16, 8, 16, 16
    x = jax.random.normal(k_x, (batch, channels, H, W), jnp.float32)   # NCHW
    params = make_params(k_p, channels)

    B = pick_block_images(batch, H)     # -> 8 images/step, grid=(2,), 128-row matmuls
    ref = jax.block_until_ready(_reference_lska7(x, params))

    # f32-MXU path: strict check against the f32 reference.
    consts_f32 = prepare_constants(params, H, W, channels, B, matmul_dtype=jnp.float32)
    fwd_f32 = jax.jit(functools.partial(lska7_forward, block_images=B))
    out_f32 = jax.block_until_ready(fwd_f32(x, consts_f32))
    assert out_f32.shape == (batch, channels, H, W), out_f32.shape
    err_f32 = float(jnp.max(jnp.abs(out_f32 - ref)))
    assert jnp.allclose(out_f32, ref, atol=1e-3, rtol=1e-3), err_f32

    # bf16-MXU path (fast default): bf16 operands, f32 accumulation.
    consts_bf16 = prepare_constants(params, H, W, channels, B, matmul_dtype=jnp.bfloat16)
    fwd_bf16 = jax.jit(functools.partial(lska7_forward, block_images=B))
    out_bf16 = jax.block_until_ready(fwd_bf16(x, consts_bf16))
    err_bf16 = float(jnp.max(jnp.abs(out_bf16 - ref)))
    rel_l2 = float(jnp.linalg.norm(out_bf16 - ref) / jnp.linalg.norm(ref))
    assert rel_l2 < 1e-2, (rel_l2, err_bf16)

    print("KERNEL_OK")
</pallas_src>

<mosaic_0001>
module attributes {stable_mosaic.version = 11 : i64} {
  func.func @_lska7_kernel(%arg0: i32, %arg1: memref<128x128xf32, #tpu.memory_space<vmem>>, %arg2: memref<3x128x128xf32, #tpu.memory_space<vmem>>, %arg3: memref<4x128x128xf32, #tpu.memory_space<vmem>>, %arg4: memref<6x128xf32, #tpu.memory_space<vmem>>, %arg5: memref<3x128xf32, #tpu.memory_space<vmem>>, %arg6: memref<2x128x128xf32, #tpu.memory_space<vmem>>, %arg7: memref<2x128xf32, #tpu.memory_space<vmem>>, %arg8: memref<128x128xf32, #tpu.memory_space<vmem>>) attributes {dimension_semantics = [#tpu.dimension_semantics<parallel>], iteration_bounds = array<i64: 2>, scalar_prefetch = 0 : i64, scratch_operands = 0 : i64, tpu.core_type = #tpu.core_type<tc>, window_params = [{transform_indices = @transform_0, window_bounds = array<i64: 128, 128>}, {pipeline_mode = #tpu.pipeline_mode<synchronous>, transform_indices = @transform_1, window_bounds = array<i64: 3, 128, 128>}, {pipeline_mode = #tpu.pipeline_mode<synchronous>, transform_indices = @transform_2, window_bounds = array<i64: 4, 128, 128>}, {pipeline_mode = #tpu.pipeline_mode<synchronous>, transform_indices = @transform_3, window_bounds = array<i64: 6, 128>}, {pipeline_mode = #tpu.pipeline_mode<synchronous>, transform_indices = @transform_4, window_bounds = array<i64: 3, 128>}, {pipeline_mode = #tpu.pipeline_mode<synchronous>, transform_indices = @transform_5, window_bounds = array<i64: 2, 128, 128>}, {pipeline_mode = #tpu.pipeline_mode<synchronous>, transform_indices = @transform_6, window_bounds = array<i64: 2, 128>}, {transform_indices = @transform_7, window_bounds = array<i64: 128, 128>}]} {
    %c0 = arith.constant 0 : index
    %c0_0 = arith.constant 0 : index
    %0 = vector.load %arg1[%c0, %c0_0] : memref<128x128xf32, #tpu.memory_space<vmem>>, vector<128x128xf32>
    %c0_1 = arith.constant 0 : index
    %c0_2 = arith.constant 0 : index
    %1 = vector.load %arg7[%c0_1, %c0_2] : memref<2x128xf32, #tpu.memory_space<vmem>>, vector<1x128xf32>
    %c1 = arith.constant 1 : index
    %c0_3 = arith.constant 0 : index
    %2 = vector.load %arg7[%c1, %c0_3] : memref<2x128xf32, #tpu.memory_space<vmem>>, vector<1x128xf32>
    %c0_4 = arith.constant 0 : index
    %c0_5 = arith.constant 0 : index
    %c0_6 = arith.constant 0 : index
    %3 = vector.load %arg2[%c0_4, %c0_5, %c0_6] : memref<3x128x128xf32, #tpu.memory_space<vmem>>, vector<1x128x128xf32>
    %4 = vector.shape_cast %3 : vector<1x128x128xf32> to vector<128x128xf32>
    %cst = arith.constant dense<0.000000e+00> : vector<128x128xf32>
    %5 = tpu.matmul %0, %4, %cst {dimension_numbers = #tpu.dot_dimension_numbers<[1], [0], [0], [1], [0, 0, 1, 1], [], []>} : vector<128x128xf32>, vector<128x128xf32>, vector<128x128xf32> -> vector<128x128xf32>
    %c0_7 = arith.constant 0 : index
    %c0_8 = arith.constant 0 : index
    %6 = vector.load %arg5[%c0_7, %c0_8] : memref<3x128xf32, #tpu.memory_space<vmem>>, vector<1x128xf32>
    %7 = vector.broadcast %6 : vector<1x128xf32> to vector<128x128xf32>
    %8 = arith.addf %5, %7 : vector<128x128xf32>
    %cst_9 = arith.constant 0.000000e+00 : f32
    %9 = vector.broadcast %cst_9 : f32 to vector<128x128xf32>
    %10 = arith.maximumf %8, %9 : vector<128x128xf32>
    %c0_10 = arith.constant 0 : index
    %c0_11 = arith.constant 0 : index
    %c0_12 = arith.constant 0 : index
    %11 = vector.load %arg6[%c0_10, %c0_11, %c0_12] : memref<2x128x128xf32, #tpu.memory_space<vmem>>, vector<1x128x128xf32>
    %12 = vector.shape_cast %11 : vector<1x128x128xf32> to vector<128x128xf32>
    %c1_13 = arith.constant 1 : index
    %c0_14 = arith.constant 0 : index
    %13 = vector.load %arg4[%c1_13, %c0_14] : memref<6x128xf32, #tpu.memory_space<vmem>>, vector<1x128xf32>
    %14 = vector.broadcast %13 : vector<1x128xf32> to vector<128x128xf32>
    %15 = arith.mulf %10, %14 : vector<128x128xf32>
    %16 = arith.addf %12, %15 : vector<128x128xf32>
    %c0_15 = arith.constant 0 : index
    %c0_16 = arith.constant 0 : index
    %c0_17 = arith.constant 0 : index
    %17 = vector.load %arg3[%c0_15, %c0_16, %c0_17] : memref<4x128x128xf32, #tpu.memory_space<vmem>>, vector<1x128x128xf32>
    %18 = vector.shape_cast %17 : vector<1x128x128xf32> to vector<128x128xf32>
    %cst_18 = arith.constant dense<0.000000e+00> : vector<128x128xf32>
    %19 = tpu.matmul %18, %10, %cst_18 {dimension_numbers = #tpu.dot_dimension_numbers<[1], [0], [0], [1], [0, 0, 1, 1], [], []>} : vector<128x128xf32>, vector<128x128xf32>, vector<128x128xf32> -> vector<128x128xf32>
    %c0_19 = arith.constant 0 : index
    %c0_20 = arith.constant 0 : index
    %20 = vector.load %arg4[%c0_19, %c0_20] : memref<6x128xf32, #tpu.memory_space<vmem>>, vector<1x128xf32>
    %21 = vector.broadcast %20 : vector<1x128xf32> to vector<128x128xf32>
    %22 = arith.mulf %19, %21 : vector<128x128xf32>
    %23 = arith.addf %16, %22 : vector<128x128xf32>
    %c1_21 = arith.constant 1 : index
    %c0_22 = arith.constant 0 : index
    %c0_23 = arith.constant 0 : index
    %24 = vector.load %arg3[%c1_21, %c0_22, %c0_23] : memref<4x128x128xf32, #tpu.memory_space<vmem>>, vector<1x128x128xf32>
    %25 = vector.shape_cast %24 : vector<1x128x128xf32> to vector<128x128xf32>
    %cst_24 = arith.constant dense<0.000000e+00> : vector<128x128xf32>
    %26 = tpu.matmul %25, %10, %cst_24 {dimension_numbers = #tpu.dot_dimension_numbers<[1], [0], [0], [1], [0, 0, 1, 1], [], []>} : vector<128x128xf32>, vector<128x128xf32>, vector<128x128xf32> -> vector<128x128xf32>
    %c2 = arith.constant 2 : index
    %c0_25 = arith.constant 0 : index
    %27 = vector.load %arg4[%c2, %c0_25] : memref<6x128xf32, #tpu.memory_space<vmem>>, vector<1x128xf32>
    %28 = vector.broadcast %27 : vector<1x128xf32> to vector<128x128xf32>
    %29 = arith.mulf %26, %28 : vector<128x128xf32>
    %30 = arith.addf %23, %29 : vector<128x128xf32>
    %cst_26 = arith.constant 0.000000e+00 : f32
    %31 = vector.broadcast %cst_26 : f32 to vector<128x128xf32>
    %32 = arith.maximumf %30, %31 : vector<128x128xf32>
    %c1_27 = arith.constant 1 : index
    %c0_28 = arith.constant 0 : index
    %c0_29 = arith.constant 0 : index
    %33 = vector.load %arg2[%c1_27, %c0_28, %c0_29] : memref<3x128x128xf32, #tpu.memory_space<vmem>>, vector<1x128x128xf32>
    %34 = vector.shape_cast %33 : vector<1x128x128xf32> to vector<128x128xf32>
    %cst_30 = arith.constant dense<0.000000e+00> : vector<128x128xf32>
    %35 = tpu.matmul %32, %34, %cst_30 {dimension_numbers = #tpu.dot_dimension_numbers<[1], [0], [0], [1], [0, 0, 1, 1], [], []>} : vector<128x128xf32>, vector<128x128xf32>, vector<128x128xf32> -> vector<128x128xf32>
    %c1_31 = arith.constant 1 : index
    %c0_32 = arith.constant 0 : index
    %36 = vector.load %arg5[%c1_31, %c0_32] : memref<3x128xf32, #tpu.memory_space<vmem>>, vector<1x128xf32>
    %37 = vector.broadcast %36 : vector<1x128xf32> to vector<128x128xf32>
    %38 = arith.addf %35, %37 : vector<128x128xf32>
    %cst_33 = arith.constant 0.000000e+00 : f32
    %39 = vector.broadcast %cst_33 : f32 to vector<128x128xf32>
    %40 = arith.maximumf %38, %39 : vector<128x128xf32>
    %c1_34 = arith.constant 1 : index
    %c0_35 = arith.constant 0 : index
    %c0_36 = arith.constant 0 : index
    %41 = vector.load %arg6[%c1_34, %c0_35, %c0_36] : memref<2x128x128xf32, #tpu.memory_space<vmem>>, vector<1x128x128xf32>
    %42 = vector.shape_cast %41 : vector<1x128x128xf32> to vector<128x128xf32>
    %c4 = arith.constant 4 : index
    %c0_37 = arith.constant 0 : index
    %43 = vector.load %arg4[%c4, %c0_37] : memref<6x128xf32, #tpu.memory_space<vmem>>, vector<1x128xf32>
    %44 = vector.broadcast %43 : vector<1x128xf32> to vector<128x128xf32>
    %45 = arith.mulf %40, %44 : vector<128x128xf32>
    %46 = arith.addf %42, %45 : vector<128x128xf32>
    %c2_38 = arith.constant 2 : index
    %c0_39 = arith.constant 0 : index
    %c0_40 = arith.constant 0 : index
    %47 = vector.load %arg3[%c2_38, %c0_39, %c0_40] : memref<4x128x128xf32, #tpu.memory_space<vmem>>, vector<1x128x128xf32>
    %48 = vector.shape_cast %47 : vector<1x128x128xf32> to vector<128x128xf32>
    %cst_41 = arith.constant dense<0.000000e+00> : vector<128x128xf32>
    %49 = tpu.matmul %48, %40, %cst_41 {dimension_numbers = #tpu.dot_dimension_numbers<[1], [0], [0], [1], [0, 0, 1, 1], [], []>} : vector<128x128xf32>, vector<128x128xf32>, vector<128x128xf32> -> vector<128x128xf32>
    %c3 = arith.constant 3 : index
    %c0_42 = arith.constant 0 : index
    %50 = vector.load %arg4[%c3, %c0_42] : memref<6x128xf32, #tpu.memory_space<vmem>>, vector<1x128xf32>
    %51 = vector.broadcast %50 : vector<1x128xf32> to vector<128x128xf32>
    %52 = arith.mulf %49, %51 : vector<128x128xf32>
    %53 = arith.addf %46, %52 : vector<128x128xf32>
    %c3_43 = arith.constant 3 : index
    %c0_44 = arith.constant 0 : index
    %c0_45 = arith.constant 0 : index
    %54 = vector.load %arg3[%c3_43, %c0_44, %c0_45] : memref<4x128x128xf32, #tpu.memory_space<vmem>>, vector<1x128x128xf32>
    %55 = vector.shape_cast %54 : vector<1x128x128xf32> to vector<128x128xf32>
    %cst_46 = arith.constant dense<0.000000e+00> : vector<128x128xf32>
    %56 = tpu.matmul %55, %40, %cst_46 {dimension_numbers = #tpu.dot_dimension_numbers<[1], [0], [0], [1], [0, 0, 1, 1], [], []>} : vector<128x128xf32>, vector<128x128xf32>, vector<128x128xf32> -> vector<128x128xf32>
    %c5 = arith.constant 5 : index
    %c0_47 = arith.constant 0 : index
    %57 = vector.load %arg4[%c5, %c0_47] : memref<6x128xf32, #tpu.memory_space<vmem>>, vector<1x128xf32>
    %58 = vector.broadcast %57 : vector<1x128xf32> to vector<128x128xf32>
    %59 = arith.mulf %56, %58 : vector<128x128xf32>
    %60 = arith.addf %53, %59 : vector<128x128xf32>
    %cst_48 = arith.constant 0.000000e+00 : f32
    %61 = vector.broadcast %cst_48 : f32 to vector<128x128xf32>
    %62 = arith.maximumf %60, %61 : vector<128x128xf32>
    %c2_49 = arith.constant 2 : index
    %c0_50 = arith.constant 0 : index
    %c0_51 = arith.constant 0 : index
    %63 = vector.load %arg2[%c2_49, %c0_50, %c0_51] : memref<3x128x128xf32, #tpu.memory_space<vmem>>, vector<1x128x128xf32>
    %64 = vector.shape_cast %63 : vector<1x128x128xf32> to vector<128x128xf32>
    %cst_52 = arith.constant dense<0.000000e+00> : vector<128x128xf32>
    %65 = tpu.matmul %62, %64, %cst_52 {dimension_numbers = #tpu.dot_dimension_numbers<[1], [0], [0], [1], [0, 0, 1, 1], [], []>} : vector<128x128xf32>, vector<128x128xf32>, vector<128x128xf32> -> vector<128x128xf32>
    %c2_53 = arith.constant 2 : index
    %c0_54 = arith.constant 0 : index
    %66 = vector.load %arg5[%c2_53, %c0_54] : memref<3x128xf32, #tpu.memory_space<vmem>>, vector<1x128xf32>
    %67 = vector.broadcast %66 : vector<1x128xf32> to vector<128x128xf32>
    %68 = arith.addf %65, %67 : vector<128x128xf32>
    %cst_55 = arith.constant 0.000000e+00 : f32
    %69 = vector.broadcast %cst_55 : f32 to vector<128x128xf32>
    %70 = arith.maximumf %68, %69 : vector<128x128xf32>
    %71 = vector.broadcast %1 : vector<1x128xf32> to vector<128x128xf32>
    %72 = arith.mulf %70, %71 : vector<128x128xf32>
    %73 = vector.broadcast %2 : vector<1x128xf32> to vector<128x128xf32>
    %74 = arith.addf %72, %73 : vector<128x128xf32>
    %75 = arith.mulf %0, %74 : vector<128x128xf32>
    %cst_56 = arith.constant 0.000000e+00 : f32
    %76 = vector.broadcast %cst_56 : f32 to vector<128x128xf32>
    %77 = arith.maximumf %75, %76 : vector<128x128xf32>
    %78 = vector.broadcast %1 : vector<1x128xf32> to vector<128x128xf32>
    %79 = arith.mulf %77, %78 : vector<128x128xf32>
    %80 = vector.broadcast %2 : vector<1x128xf32> to vector<128x128xf32>
    %81 = arith.addf %79, %80 : vector<128x128xf32>
    %c0_57 = arith.constant 0 : index
    %c0_58 = arith.constant 0 : index
    %82 = vector.load %arg8[%c0_57, %c0_58] : memref<128x128xf32, #tpu.memory_space<vmem>>, vector<128x128xf32>
    tpu.vector_store %arg8[%c0_57, %c0_58], %81 {strides = array<i32>} : memref<128x128xf32, #tpu.memory_space<vmem>>, vector<128x128xf32>,
    return
  }
  func.func @transform_0(%arg0: i32) -> (i32, i32) {
    %c0_i32 = arith.constant 0 : i32
    %c0_i32_0 = arith.constant 0 : i32
    return %arg0, %c0_i32 : i32, i32
  }
  func.func @transform_1(%arg0: i32) -> (i32, i32, i32) {
    %c0_i32 = arith.constant 0 : i32
    %c0_i32_0 = arith.constant 0 : i32
    %c0_i32_1 = arith.constant 0 : i32
    %c0_i32_2 = arith.constant 0 : i32
    return %c0_i32, %c0_i32_0, %c0_i32_1 : i32, i32, i32
  }
  func.func @transform_2(%arg0: i32) -> (i32, i32, i32) {
    %c0_i32 = arith.constant 0 : i32
    %c0_i32_0 = arith.constant 0 : i32
    %c0_i32_1 = arith.constant 0 : i32
    %c0_i32_2 = arith.constant 0 : i32
    return %c0_i32, %c0_i32_0, %c0_i32_1 : i32, i32, i32
  }
  func.func @transform_3(%arg0: i32) -> (i32, i32) {
    %c0_i32 = arith.constant 0 : i32
    %c0_i32_0 = arith.constant 0 : i32
    %c0_i32_1 = arith.constant 0 : i32
    return %c0_i32, %c0_i32_0 : i32, i32
  }
  func.func @transform_4(%arg0: i32) -> (i32, i32) {
    %c0_i32 = arith.constant 0 : i32
    %c0_i32_0 = arith.constant 0 : i32
    %c0_i32_1 = arith.constant 0 : i32
    return %c0_i32, %c0_i32_0 : i32, i32
  }
  func.func @transform_5(%arg0: i32) -> (i32, i32, i32) {
    %c0_i32 = arith.constant 0 : i32
    %c0_i32_0 = arith.constant 0 : i32
    %c0_i32_1 = arith.constant 0 : i32
    %c0_i32_2 = arith.constant 0 : i32
    return %c0_i32, %c0_i32_0, %c0_i32_1 : i32, i32, i32
  }
  func.func @transform_6(%arg0: i32) -> (i32, i32) {
    %c0_i32 = arith.constant 0 : i32
    %c0_i32_0 = arith.constant 0 : i32
    %c0_i32_1 = arith.constant 0 : i32
    return %c0_i32, %c0_i32_0 : i32, i32
  }
  func.func @transform_7(%arg0: i32) -> (i32, i32) {
    %c0_i32 = arith.constant 0 : i32
    %c0_i32_0 = arith.constant 0 : i32
    return %arg0, %c0_i32 : i32, i32
  }
}

</mosaic_0001>

<llo_original>
// kernel: lska7_forward.1
$region0: #{lska7_forward.1}
  #allocation0 [shape = 'u32[]', space=smem, size = 0x4, offset = 0x4, fixed_abs, tag = 'smem constant byte address 0x4 - core index']
  #allocation1 [shape = 'u32[72,128]{1,0:T(1,128)}', space=vmem, size = 0x9000, scoped, tag = 'internal scratch']
  %s0 = inlined_call_operand.vmem [shape: f32[256,128], index: 0, kind: input, shape index: {}]
  %s1 = inlined_call_operand.vmem [shape: f32[3,128,128], index: 1, kind: input, shape index: {}]
  %s2 = inlined_call_operand.vmem [shape: f32[4,128,128], index: 2, kind: input, shape index: {}]
  %s3 = inlined_call_operand.vmem [shape: f32[6,128], index: 3, kind: input, shape index: {}]
  %s4 = inlined_call_operand.vmem [shape: f32[3,128], index: 4, kind: input, shape index: {}]
  %s5 = inlined_call_operand.vmem [shape: f32[2,128,128], index: 5, kind: input, shape index: {}]
  %s6 = inlined_call_operand.vmem [shape: f32[2,128], index: 6, kind: input, shape index: {}]
  %s7 = inlined_call_operand.vmem [shape: f32[256,128], index: 7, kind: output, shape index: {}]
  %s8 = sld [smem:[#allocation0]]
  $region61: #{lska7_forward.1} parent=0
    _
  %s10 = ssub.s32 1, %s8
  %s11 = scalar_select 0, %s10, %s8
  loop: start=0, step=1, limit=4
  $region2: #{lska7_forward.1} parent=0 // loop_pre_header
    _
  $region3: #{lska7_forward.1} parent=0 // loop_header
    %s13 = sphi 0, %s17
    %p14 = scmp.ge.s32.totalorder %s13, 4
    %s23 = sphi 0, %s25
    %s26 = sphi 0, %s23
    %s27 = sphi 0, %s26
    %s43 = sphi 0, %s27
    %s47 = sphi 0, %s47
    %s49 = sphi 0, %s47
    %s50 = sphi 0, %s49
    %s64 = sphi 0, %s50
    %s68 = sphi 0, %s68
    %s70 = sphi 0, %s68
    %s71 = sphi 0, %s70
    %s85 = sphi 0, %s71
    %s89 = sphi 0, %s89
    %s91 = sphi 0, %s89
    %s92 = sphi 0, %s91
    %s106 = sphi 0, %s92
    %s110 = sphi 0, %s110
    %s112 = sphi 0, %s110
    %s113 = sphi 0, %s112
    %s127 = sphi 0, %s113
    %s131 = sphi 0, %s131
    %s133 = sphi 0, %s131
    %s134 = sphi 0, %s133
    %s148 = sphi 0, %s134
    %s152 = sphi 0, %s152
    %s154 = sphi 0, %s152
    %s155 = sphi 0, %s154
    %s169 = sphi 0, %s155
    %s175 = sphi 0, %s177
    %s178 = sphi 0, %s175
    %s179 = sphi 0, %s178
    %s195 = sphi 0, %s179
  $region4: #{lska7_forward.1} parent=0 // loop_header_branch
    %16 = sbr.rel (%p14) target = $region8
  $region5: #{lska7_forward.1} parent=0 // loop_body
    %s18 = ssub.s32 %s13, 1
    %s19 = ssub.s32 %s13, 2
    %s20 = sadd.s32 %s13, 1
    %s21 = ssub.s32 %s13, %s20
    %p22 = scmp.eq.s32.totalorder %s21, 0
    %s24 = sadd.s32 %s23, 1
    %s25 = scalar_select %p22, %s23, %s24
    %p28 = pneg %p22
    %p29 = scmp.eq.s32.totalorder %s13, 1
    %p30 = por %p28, %p29
    %p31 = scmp.ne.s32.totalorder %s23, %s26
    %p32 = scmp.eq.s32.totalorder %s13, 0
    %p33 = por %p31, %p32
    %p34 = scmp.ne.s32.totalorder %s23, %s26
    %p35 = scmp.eq.s32.totalorder %s18, 1
    %p36 = por %p34, %p35
    %p37 = scmp.ne.s32.totalorder %s26, %s27
    %p38 = scmp.eq.s32.totalorder %s18, 0
    %p39 = por %p37, %p38
    %p40 = scmp.ne.s32.totalorder %s26, %s27
    %p41 = scmp.eq.s32.totalorder %s19, 1
    %p42 = por %p40, %p41
    %p44 = scmp.ne.s32.totalorder %s27, %s43
    %p45 = scmp.eq.s32.totalorder %s19, 0
    %p46 = por %p44, %p45
    %s48 = sadd.s32 %s47, 1
    %p51 = scmp.eq.s32.totalorder %s13, 1
    %p52 = scmp.ne.s32.totalorder %s47, %s49
    %p53 = scmp.eq.s32.totalorder %s13, 0
    %p54 = por %p52, %p53
    %p55 = scmp.ne.s32.totalorder %s47, %s49
    %p56 = scmp.eq.s32.totalorder %s18, 1
    %p57 = por %p55, %p56
    %p58 = scmp.ne.s32.totalorder %s49, %s50
    %p59 = scmp.eq.s32.totalorder %s18, 0
    %p60 = por %p58, %p59
    %p61 = scmp.ne.s32.totalorder %s49, %s50
    %p62 = scmp.eq.s32.totalorder %s19, 1
    %p63 = por %p61, %p62
    %p65 = scmp.ne.s32.totalorder %s50, %s64
    %p66 = scmp.eq.s32.totalorder %s19, 0
    %p67 = por %p65, %p66
    %s69 = sadd.s32 %s68, 1
    %p72 = scmp.eq.s32.totalorder %s13, 1
    %p73 = scmp.ne.s32.totalorder %s68, %s70
    %p74 = scmp.eq.s32.totalorder %s13, 0
    %p75 = por %p73, %p74
    %p76 = scmp.ne.s32.totalorder %s68, %s70
    %p77 = scmp.eq.s32.totalorder %s18, 1
    %p78 = por %p76, %p77
    %p79 = scmp.ne.s32.totalorder %s70, %s71
    %p80 = scmp.eq.s32.totalorder %s18, 0
    %p81 = por %p79, %p80
    %p82 = scmp.ne.s32.totalorder %s70, %s71
    %p83 = scmp.eq.s32.totalorder %s19, 1
    %p84 = por %p82, %p83
    %p86 = scmp.ne.s32.totalorder %s71, %s85
    %p87 = scmp.eq.s32.totalorder %s19, 0
    %p88 = por %p86, %p87
    %s90 = sadd.s32 %s89, 1
    %p93 = scmp.eq.s32.totalorder %s13, 1
    %p94 = scmp.ne.s32.totalorder %s89, %s91
    %p95 = scmp.eq.s32.totalorder %s13, 0
    %p96 = por %p94, %p95
    %p97 = scmp.ne.s32.totalorder %s89, %s91
    %p98 = scmp.eq.s32.totalorder %s18, 1
    %p99 = por %p97, %p98
    %p100 = scmp.ne.s32.totalorder %s91, %s92
    %p101 = scmp.eq.s32.totalorder %s18, 0
    %p102 = por %p100, %p101
    %p103 = scmp.ne.s32.totalorder %s91, %s92
    %p104 = scmp.eq.s32.totalorder %s19, 1
    %p105 = por %p103, %p104
    %p107 = scmp.ne.s32.totalorder %s92, %s106
    %p108 = scmp.eq.s32.totalorder %s19, 0
    %p109 = por %p107, %p108
    %s111 = sadd.s32 %s110, 1
    %p114 = scmp.eq.s32.totalorder %s13, 1
    %p115 = scmp.ne.s32.totalorder %s110, %s112
    %p116 = scmp.eq.s32.totalorder %s13, 0
    %p117 = por %p115, %p116
    %p118 = scmp.ne.s32.totalorder %s110, %s112
    %p119 = scmp.eq.s32.totalorder %s18, 1
    %p120 = por %p118, %p119
    %p121 = scmp.ne.s32.totalorder %s112, %s113
    %p122 = scmp.eq.s32.totalorder %s18, 0
    %p123 = por %p121, %p122
    %p124 = scmp.ne.s32.totalorder %s112, %s113
    %p125 = scmp.eq.s32.totalorder %s19, 1
    %p126 = por %p124, %p125
    %p128 = scmp.ne.s32.totalorder %s113, %s127
    %p129 = scmp.eq.s32.totalorder %s19, 0
    %p130 = por %p128, %p129
    %s132 = sadd.s32 %s131, 1
    %p135 = scmp.eq.s32.totalorder %s13, 1
    %p136 = scmp.ne.s32.totalorder %s131, %s133
    %p137 = scmp.eq.s32.totalorder %s13, 0
    %p138 = por %p136, %p137
    %p139 = scmp.ne.s32.totalorder %s131, %s133
    %p140 = scmp.eq.s32.totalorder %s18, 1
    %p141 = por %p139, %p140
    %p142 = scmp.ne.s32.totalorder %s133, %s134
    %p143 = scmp.eq.s32.totalorder %s18, 0
    %p144 = por %p142, %p143
    %p145 = scmp.ne.s32.totalorder %s133, %s134
    %p146 = scmp.eq.s32.totalorder %s19, 1
    %p147 = por %p145, %p146
    %p149 = scmp.ne.s32.totalorder %s134, %s148
    %p150 = scmp.eq.s32.totalorder %s19, 0
    %p151 = por %p149, %p150
    %s153 = sadd.s32 %s152, 1
    %p156 = scmp.eq.s32.totalorder %s13, 1
    %p157 = scmp.ne.s32.totalorder %s152, %s154
    %p158 = scmp.eq.s32.totalorder %s13, 0
    %p159 = por %p157, %p158
    %p160 = scmp.ne.s32.totalorder %s152, %s154
    %p161 = scmp.eq.s32.totalorder %s18, 1
    %p162 = por %p160, %p161
    %p163 = scmp.ne.s32.totalorder %s154, %s155
    %p164 = scmp.eq.s32.totalorder %s18, 0
    %p165 = por %p163, %p164
    %p166 = scmp.ne.s32.totalorder %s154, %s155
    %p167 = scmp.eq.s32.totalorder %s19, 1
    %p168 = por %p166, %p167
    %p170 = scmp.ne.s32.totalorder %s155, %s169
    %p171 = scmp.eq.s32.totalorder %s19, 0
    %p172 = por %p170, %p171
    %s173 = ssub.s32 %s13, %s20
    %p174 = scmp.eq.s32.totalorder %s173, 0
    %s176 = sadd.s32 %s175, 1
    %s177 = scalar_select %p174, %s175, %s176
    %p180 = pneg %p174
    %p181 = scmp.eq.s32.totalorder %s13, 1
    %p182 = por %p180, %p181
    %p183 = scmp.ne.s32.totalorder %s175, %s178
    %p184 = scmp.eq.s32.totalorder %s13, 0
    %p185 = por %p183, %p184
    %p186 = scmp.ne.s32.totalorder %s175, %s178
    %p187 = scmp.eq.s32.totalorder %s18, 1
    %p188 = por %p186, %p187
    %p189 = scmp.ne.s32.totalorder %s178, %s179
    %p190 = scmp.eq.s32.totalorder %s18, 0
    %p191 = por %p189, %p190
    %p192 = scmp.ne.s32.totalorder %s178, %s179
    %p193 = scmp.eq.s32.totalorder %s19, 1
    %p194 = por %p192, %p193
    %p196 = scmp.ne.s32.totalorder %s179, %s195
    %p197 = scmp.eq.s32.totalorder %s19, 0
    %p198 = por %p196, %p197
    %p199 = scmp.le.s32.totalorder 1, %s13
    %p200 = scmp.lt.s32.totalorder %s13, 3
    %p201 = pnand %p199, %p200
    %p202 = pneg %p201
    // Predicated region
    $region9: #{lska7_forward.1} parent=5 // pred_check
      _
    $region10: #{lska7_forward.1} parent=5 // pred_check_branch
      %204 = sbr.rel (%p201) target = $region12
    $region11: #{lska7_forward.1} parent=5 // pred_region
      %s205 = ssub.s32 %s13, 1
      // Predicated region
      $region13: #{lska7_forward.1} parent=11 // pred_check
        %p206 = pneg %p60
      $region14: #{lska7_forward.1} parent=11 // pred_check_branch
        %208 = sbr.rel (%p206) target = $region16
      $region15: #{lska7_forward.1} parent=11 // pred_region
        _
      $region16: #{lska7_forward.1} parent=11 // pred_fallthru
        _
      // Predicated region
      $region17: #{lska7_forward.1} parent=11 // pred_check
        %p209 = pneg %p81
      $region18: #{lska7_forward.1} parent=11 // pred_check_branch
        %211 = sbr.rel (%p209) target = $region20
      $region19: #{lska7_forward.1} parent=11 // pred_region
        _
      $region20: #{lska7_forward.1} parent=11 // pred_fallthru
        _
      // Predicated region
      $region21: #{lska7_forward.1} parent=11 // pred_check
        %p212 = pneg %p102
      $region22: #{lska7_forward.1} parent=11 // pred_check_branch
        %214 = sbr.rel (%p212) target = $region24
      $region23: #{lska7_forward.1} parent=11 // pred_region
        _
      $region24: #{lska7_forward.1} parent=11 // pred_fallthru
        _
      // Predicated region
      $region25: #{lska7_forward.1} parent=11 // pred_check
        %p215 = pneg %p123
      $region26: #{lska7_forward.1} parent=11 // pred_check_branch
        %217 = sbr.rel (%p215) target = $region28
      $region27: #{lska7_forward.1} parent=11 // pred_region
        _
      $region28: #{lska7_forward.1} parent=11 // pred_fallthru
        _
      // Predicated region
      $region29: #{lska7_forward.1} parent=11 // pred_check
        %p218 = pneg %p144
      $region30: #{lska7_forward.1} parent=11 // pred_check_branch
        %220 = sbr.rel (%p218) target = $region32
      $region31: #{lska7_forward.1} parent=11 // pred_region
        _
      $region32: #{lska7_forward.1} parent=11 // pred_fallthru
        _
      // Predicated region
      $region33: #{lska7_forward.1} parent=11 // pred_check
        %p221 = pneg %p165
      $region34: #{lska7_forward.1} parent=11 // pred_check_branch
        %223 = sbr.rel (%p221) target = $region36
      $region35: #{lska7_forward.1} parent=11 // pred_region
        _
      $region36: #{lska7_forward.1} parent=11 // pred_fallthru
        _
    $region12: #{lska7_forward.1} parent=5 // pred_fallthru
      _
    %p224 = scmp.lt.s32.totalorder %s13, 2
    // Predicated region
    $region37: #{lska7_forward.1} parent=5 // pred_check
      %p225 = pneg %p224
    $region38: #{lska7_forward.1} parent=5 // pred_check_branch
      %227 = sbr.rel (%p225) target = $region40
    $region39: #{lska7_forward.1} parent=5 // pred_region
      // Predicated region
      $region41: #{lska7_forward.1} parent=39 // pred_check
        %p228 = pneg %p33
      $region42: #{lska7_forward.1} parent=39 // pred_check_branch
        %230 = sbr.rel (%p228) target = $region44
      $region43: #{lska7_forward.1} parent=39 // pred_region
        %s231 = smul.u32 16, %s13
        %p232 = scmp.lt.s32.totalorder %s231, 31
        %s233 = scalar_select %p232, %s231, 31
        %s234 = smul.addr %s233, 8
        %s235 = scalar_lea.vmem %s0, %s234
        %s236 = smul.u32 16, %s13
      $region44: #{lska7_forward.1} parent=39 // pred_fallthru
        _
    $region40: #{lska7_forward.1} parent=5 // pred_fallthru
      _
    %p237 = scmp.le.s32.totalorder 1, %s13
    %p238 = scmp.lt.s32.totalorder %s13, 3
    %p239 = pnand %p237, %p238
    %p240 = pneg %p239
    // Predicated region
    $region45: #{lska7_forward.1} parent=5 // pred_check
      _
    $region46: #{lska7_forward.1} parent=5 // pred_check_branch
      %242 = sbr.rel (%p239) target = $region48
    $region47: #{lska7_forward.1} parent=5 // pred_region
      %s243 = ssub.s32 %s13, 1
      %s244 = smul.u32 16, %s18
      %p245 = scmp.lt.s32.totalorder %s244, 31
      %s246 = scalar_select %p245, %s244, 31
      %s247 = smul.addr %s246, 8
      %s248 = scalar_lea.vmem %s0, %s247
      %p249 = pneg %p39
      %p250 = pneg %p36
      %p251 = pneg %p60
      %p252 = pneg %p57
      %p253 = pneg %p81
      %p254 = pneg %p78
      %p255 = pneg %p102
      %p256 = pneg %p99
      %p257 = pneg %p123
      %p258 = pneg %p120
      %p259 = pneg %p144
      %p260 = pneg %p141
      %p261 = pneg %p165
      %p262 = pneg %p162
      %p263 = pneg %p191
      %p264 = pneg %p188
      %s265 = smul.u32 16, %s18
      %p266 = scmp.lt.s32.totalorder %s265, 31
      %s267 = scalar_select %p266, %s265, 31
      %s268 = smul.addr %s267, 8
      %s269 = scalar_lea.vmem %s7, %s268
      %s270 = smul.u32 16, %s18
      %p271 = scmp.lt.s32.totalorder %s270, 31
      %s272 = scalar_select %p271, %s270, 31
      %s273 = smul.addr %s272, 8
      %s274 = scalar_lea.vmem %s0, %s273
      %s275 = smul.u32 16, %s18
      %s276 = smul.u32 16, %s18
      %p277 = scmp.lt.s32.totalorder %s276, 31
      %s278 = scalar_select %p277, %s276, 31
      %s279 = smul.addr %s278, 8
      %s280 = scalar_lea.vmem %s7, %s279
      %s281 = smul.u32 16, %s18
      %v282 = vld [vmem:[%s274] sm:$0xff]
      %v283 = vld [vmem:[%s274 + $0x8] sm:$0xff]
      %v284 = vld [vmem:[%s274 + $0x10] sm:$0xff]
      %v285 = vld [vmem:[%s274 + $0x18] sm:$0xff]
      %v286 = vld [vmem:[%s274 + $0x20] sm:$0xff]
      %v287 = vld [vmem:[%s274 + $0x28] sm:$0xff]
      %v288 = vld [vmem:[%s274 + $0x30] sm:$0xff]
      %v289 = vld [vmem:[%s274 + $0x38] sm:$0xff]
      %v290 = vld [vmem:[%s274 + $0x40] sm:$0xff]
      %v291 = vld [vmem:[%s274 + $0x48] sm:$0xff]
      %v292 = vld [vmem:[%s274 + $0x50] sm:$0xff]
      %v293 = vld [vmem:[%s274 + $0x58] sm:$0xff]
      %v294 = vld [vmem:[%s274 + $0x60] sm:$0xff]
      %v295 = vld [vmem:[%s274 + $0x68] sm:$0xff]
      %v296 = vld [vmem:[%s274 + $0x70] sm:$0xff]
      %v297 = vld [vmem:[%s274 + $0x78] sm:$0xff]
      %v298 = vld [vmem:[%s6] sm:$0x1]
      %v299 = vld [vmem:[%s6 + $0x1] sm:$0x1]
      %v300 = vld [vmem:[%s1] sm:$0xff]
      %v301 = vld [vmem:[%s1 + $0x8] sm:$0xff]
      %v302 = vld [vmem:[%s1 + $0x10] sm:$0xff]
      %v303 = vld [vmem:[%s1 + $0x18] sm:$0xff]
      %v304 = vld [vmem:[%s1 + $0x20] sm:$0xff]
      %v305 = vld [vmem:[%s1 + $0x28] sm:$0xff]
      %v306 = vld [vmem:[%s1 + $0x30] sm:$0xff]
      %v307 = vld [vmem:[%s1 + $0x38] sm:$0xff]
      %v308 = vld [vmem:[%s1 + $0x40] sm:$0xff]
      %v309 = vld [vmem:[%s1 + $0x48] sm:$0xff]
      %v310 = vld [vmem:[%s1 + $0x50] sm:$0xff]
      %v311 = vld [vmem:[%s1 + $0x58] sm:$0xff]
      %v312 = vld [vmem:[%s1 + $0x60] sm:$0xff]
      %v313 = vld [vmem:[%s1 + $0x68] sm:$0xff]
      %v314 = vld [vmem:[%s1 + $0x70] sm:$0xff]
      %v315 = vld [vmem:[%s1 + $0x78] sm:$0xff]
      %v316 = vld [vmem:[%s4] sm:$0x1]
      %v317 = vperm.slane %v316, 0
      %318 = vmatpush.msra.mxu0 %v315
      %319 = vmatpush.msra.mxu0 %v314
      %320 = vmatpush.msra.mxu0 %v313
      %321 = vmatpush.msra.mxu0 %v312
      %322 = vmatpush.msra.mxu0 %v311
      %323 = vmatpush.msra.mxu0 %v310
      %324 = vmatpush.msra.mxu0 %v309
      %325 = vmatpush.msra.mxu0 %v308
      %326 = vmatpush.msra.mxu0 %v307
      %327 = vmatpush.msra.mxu0 %v306
      %328 = vmatpush.msra.mxu0 %v305
      %329 = vmatpush.msra.mxu0 %v304
      %330 = vmatpush.msra.mxu0 %v303
      %331 = vmatpush.msra.mxu0 %v302
      %332 = vmatpush.msra.mxu0 %v301
      %333 = vmatpush.msra.mxu0 %v300
      %334 = vmatmul.f32.gmra.mxu0 %v282
      %v335 = vpop.f32.mrf.mxu0
      %v336 = vadd.f32 %v317, %v335
      %337 = vmatmul.f32.gmra.mxu0 %v283
      %v338 = vpop.f32.mrf.mxu0
      %v339 = vadd.f32 %v317, %v338
      %340 = vmatmul.f32.gmra.mxu0 %v284
      %v341 = vpop.f32.mrf.mxu0
      %v342 = vadd.f32 %v317, %v341
      %343 = vmatmul.f32.gmra.mxu0 %v285
      %v344 = vpop.f32.mrf.mxu0
      %v345 = vadd.f32 %v317, %v344
      %346 = vmatmul.f32.gmra.mxu0 %v286
      %v347 = vpop.f32.mrf.mxu0
      %v348 = vadd.f32 %v317, %v347
      %349 = vmatmul.f32.gmra.mxu0 %v287
      %v350 = vpop.f32.mrf.mxu0
      %v351 = vadd.f32 %v317, %v350
      %352 = vmatmul.f32.gmra.mxu0 %v288
      %v353 = vpop.f32.mrf.mxu0
      %v354 = vadd.f32 %v317, %v353
      %355 = vmatmul.f32.gmra.mxu0 %v289
      %v356 = vpop.f32.mrf.mxu0
      %v357 = vadd.f32 %v317, %v356
      %358 = vmatmul.f32.gmra.mxu0 %v290
      %v359 = vpop.f32.mrf.mxu0
      %v360 = vadd.f32 %v317, %v359
      %361 = vmatmul.f32.gmra.mxu0 %v291
      %v362 = vpop.f32.mrf.mxu0
      %v363 = vadd.f32 %v317, %v362
      %364 = vmatmul.f32.gmra.mxu0 %v292
      %v365 = vpop.f32.mrf.mxu0
      %v366 = vadd.f32 %v317, %v365
      %367 = vmatmul.f32.gmra.mxu0 %v293
      %v368 = vpop.f32.mrf.mxu0
      %v369 = vadd.f32 %v317, %v368
      %370 = vmatmul.f32.gmra.mxu0 %v294
      %v371 = vpop.f32.mrf.mxu0
      %v372 = vadd.f32 %v317, %v371
      %373 = vmatmul.f32.gmra.mxu0 %v295
      %v374 = vpop.f32.mrf.mxu0
      %v375 = vadd.f32 %v317, %v374
      %376 = vmatmul.f32.gmra.mxu0 %v296
      %v377 = vpop.f32.mrf.mxu0
      %v378 = vadd.f32 %v317, %v377
      %379 = vmatmul.f32.gmra.mxu0 %v297
      %v380 = vpop.f32.mrf.mxu0
      %v381 = vadd.f32 %v317, %v380
      %382 = vdwg.mxu0
      %v383 = vmax.f32 %v336, 0.0
      %v384 = vmax.f32 %v339, 0.0
      %v385 = vmax.f32 %v342, 0.0
      %v386 = vmax.f32 %v345, 0.0
      %v387 = vmax.f32 %v348, 0.0
      %v388 = vmax.f32 %v351, 0.0
      %v389 = vmax.f32 %v354, 0.0
      %v390 = vmax.f32 %v357, 0.0
      %v391 = vmax.f32 %v360, 0.0
      %v392 = vmax.f32 %v363, 0.0
      %v393 = vmax.f32 %v366, 0.0
      %v394 = vmax.f32 %v369, 0.0
      %v395 = vmax.f32 %v372, 0.0
      %v396 = vmax.f32 %v375, 0.0
      %v397 = vmax.f32 %v378, 0.0
      %v398 = vmax.f32 %v381, 0.0
      %v399 = vld [vmem:[%s5] sm:$0xff]
      %v400 = vld [vmem:[%s5 + $0x8] sm:$0xff]
      %v401 = vld [vmem:[%s5 + $0x10] sm:$0xff]
      %v402 = vld [vmem:[%s5 + $0x18] sm:$0xff]
      %v403 = vld [vmem:[%s5 + $0x20] sm:$0xff]
      %v404 = vld [vmem:[%s5 + $0x28] sm:$0xff]
      %v405 = vld [vmem:[%s5 + $0x30] sm:$0xff]
      %v406 = vld [vmem:[%s5 + $0x38] sm:$0xff]
      %v407 = vld [vmem:[%s5 + $0x40] sm:$0xff]
      %v408 = vld [vmem:[%s5 + $0x48] sm:$0xff]
      %v409 = vld [vmem:[%s5 + $0x50] sm:$0xff]
      %v410 = vld [vmem:[%s5 + $0x58] sm:$0xff]
      %v411 = vld [vmem:[%s5 + $0x60] sm:$0xff]
      %v412 = vld [vmem:[%s5 + $0x68] sm:$0xff]
      %v413 = vld [vmem:[%s5 + $0x70] sm:$0xff]
      %v414 = vld [vmem:[%s5 + $0x78] sm:$0xff]
      %v415 = vld [vmem:[%s3 + $0x1] sm:$0x1]
      %v416 = vperm.slane %v415, 0
      %v417 = vmul.f32 %v383, %v416
      %v418 = vmul.f32 %v384, %v416
      %v419 = vmul.f32 %v385, %v416
      %v420 = vmul.f32 %v386, %v416
      %v421 = vmul.f32 %v387, %v416
      %v422 = vmul.f32 %v388, %v416
      %v423 = vmul.f32 %v389, %v416
      %v424 = vmul.f32 %v390, %v416
      %v425 = vmul.f32 %v391, %v416
      %v426 = vmul.f32 %v392, %v416
      %v427 = vmul.f32 %v393, %v416
      %v428 = vmul.f32 %v394, %v416
      %v429 = vmul.f32 %v395, %v416
      %v430 = vmul.f32 %v396, %v416
      %v431 = vmul.f32 %v397, %v416
      %v432 = vmul.f32 %v398, %v416
      %v433 = vadd.f32 %v399, %v417
      %v434 = vadd.f32 %v400, %v418
      %v435 = vadd.f32 %v401, %v419
      %v436 = vadd.f32 %v402, %v420
      %v437 = vadd.f32 %v403, %v421
      %v438 = vadd.f32 %v404, %v422
      %v439 = vadd.f32 %v405, %v423
      %v440 = vadd.f32 %v406, %v424
      %v441 = vadd.f32 %v407, %v425
      %v442 = vadd.f32 %v408, %v426
      %v443 = vadd.f32 %v409, %v427
      %v444 = vadd.f32 %v410, %v428
      %v445 = vadd.f32 %v411, %v429
      %v446 = vadd.f32 %v412, %v430
      %v447 = vadd.f32 %v413, %v431
      %v448 = vadd.f32 %v414, %v432
      %v449 = vld [vmem:[%s2] sm:$0xff]
      %v450 = vld [vmem:[%s2 + $0x8] sm:$0xff]
      %v451 = vld [vmem:[%s2 + $0x10] sm:$0xff]
      %v452 = vld [vmem:[%s2 + $0x18] sm:$0xff]
      %v453 = vld [vmem:[%s2 + $0x20] sm:$0xff]
      %v454 = vld [vmem:[%s2 + $0x28] sm:$0xff]
      %v455 = vld [vmem:[%s2 + $0x30] sm:$0xff]
      %v456 = vld [vmem:[%s2 + $0x38] sm:$0xff]
      %v457 = vld [vmem:[%s2 + $0x40] sm:$0xff]
      %v458 = vld [vmem:[%s2 + $0x48] sm:$0xff]
      %v459 = vld [vmem:[%s2 + $0x50] sm:$0xff]
      %v460 = vld [vmem:[%s2 + $0x58] sm:$0xff]
      %v461 = vld [vmem:[%s2 + $0x60] sm:$0xff]
      %v462 = vld [vmem:[%s2 + $0x68] sm:$0xff]
      %v463 = vld [vmem:[%s2 + $0x70] sm:$0xff]
      %v464 = vld [vmem:[%s2 + $0x78] sm:$0xff]
      %465 = vmatpush.msra.mxu0 %v398
      %466 = vmatpush.msra.mxu0 %v397
      %467 = vmatpush.msra.mxu0 %v396
      %468 = vmatpush.msra.mxu0 %v395
      %469 = vmatpush.msra.mxu0 %v394
      %470 = vmatpush.msra.mxu0 %v393
      %471 = vmatpush.msra.mxu0 %v392
      %472 = vmatpush.msra.mxu0 %v391
      %473 = vmatpush.msra.mxu0 %v390
      %474 = vmatpush.msra.mxu0 %v389
      %475 = vmatpush.msra.mxu0 %v388
      %476 = vmatpush.msra.mxu0 %v387
      %477 = vmatpush.msra.mxu0 %v386
      %478 = vmatpush.msra.mxu0 %v385
      %479 = vmatpush.msra.mxu0 %v384
      %480 = vmatpush.msra.mxu0 %v383
      %481 = vmatmul.f32.gmra.mxu0 %v449
      %v482 = vpop.f32.mrf.mxu0
      %v483 = vadd.f32 0.0, %v482
      %484 = vmatmul.f32.gmra.mxu0 %v450
      %v485 = vpop.f32.mrf.mxu0
      %v486 = vadd.f32 0.0, %v485
      %487 = vmatmul.f32.gmra.mxu0 %v451
      %v488 = vpop.f32.mrf.mxu0
      %v489 = vadd.f32 0.0, %v488
      %490 = vmatmul.f32.gmra.mxu0 %v452
      %v491 = vpop.f32.mrf.mxu0
      %v492 = vadd.f32 0.0, %v491
      %493 = vmatmul.f32.gmra.mxu0 %v453
      %v494 = vpop.f32.mrf.mxu0
      %v495 = vadd.f32 0.0, %v494
      %496 = vmatmul.f32.gmra.mxu0 %v454
      %v497 = vpop.f32.mrf.mxu0
      %v498 = vadd.f32 0.0, %v497
      %499 = vmatmul.f32.gmra.mxu0 %v455
      %v500 = vpop.f32.mrf.mxu0
      %v501 = vadd.f32 0.0, %v500
      %502 = vmatmul.f32.gmra.mxu0 %v456
      %v503 = vpop.f32.mrf.mxu0
      %v504 = vadd.f32 0.0, %v503
      %505 = vmatmul.f32.gmra.mxu0 %v457
      %v506 = vpop.f32.mrf.mxu0
      %v507 = vadd.f32 0.0, %v506
      %508 = vmatmul.f32.gmra.mxu0 %v458
      %v509 = vpop.f32.mrf.mxu0
      %v510 = vadd.f32 0.0, %v509
      %511 = vmatmul.f32.gmra.mxu0 %v459
      %v512 = vpop.f32.mrf.mxu0
      %v513 = vadd.f32 0.0, %v512
      %514 = vmatmul.f32.gmra.mxu0 %v460
      %v515 = vpop.f32.mrf.mxu0
      %v516 = vadd.f32 0.0, %v515
      %517 = vmatmul.f32.gmra.mxu0 %v461
      %v518 = vpop.f32.mrf.mxu0
      %v519 = vadd.f32 0.0, %v518
      %520 = vmatmul.f32.gmra.mxu0 %v462
      %v521 = vpop.f32.mrf.mxu0
      %v522 = vadd.f32 0.0, %v521
      %523 = vmatmul.f32.gmra.mxu0 %v463
      %v524 = vpop.f32.mrf.mxu0
      %v525 = vadd.f32 0.0, %v524
      %526 = vmatmul.f32.gmra.mxu0 %v464
      %v527 = vpop.f32.mrf.mxu0
      %v528 = vadd.f32 0.0, %v527
      %529 = vdwg.mxu0
      %v530 = vld [vmem:[%s3] sm:$0x1]
      %v531 = vperm.slane %v530, 0
      %v532 = vmul.f32 %v483, %v531
      %v533 = vmul.f32 %v486, %v531
      %v534 = vmul.f32 %v489, %v531
      %v535 = vmul.f32 %v492, %v531
      %v536 = vmul.f32 %v495, %v531
      %v537 = vmul.f32 %v498, %v531
      %v538 = vmul.f32 %v501, %v531
      %v539 = vmul.f32 %v504, %v531
      %v540 = vmul.f32 %v507, %v531
      %v541 = vmul.f32 %v510, %v531
      %v542 = vmul.f32 %v513, %v531
      %v543 = vmul.f32 %v516, %v531
      %v544 = vmul.f32 %v519, %v531
      %v545 = vmul.f32 %v522, %v531
      %v546 = vmul.f32 %v525, %v531
      %v547 = vmul.f32 %v528, %v531
      %v548 = vadd.f32 %v433, %v532
      %v549 = vadd.f32 %v434, %v533
      %v550 = vadd.f32 %v435, %v534
      %v551 = vadd.f32 %v436, %v535
      %v552 = vadd.f32 %v437, %v536
      %v553 = vadd.f32 %v438, %v537
      %v554 = vadd.f32 %v439, %v538
      %v555 = vadd.f32 %v440, %v539
      %v556 = vadd.f32 %v441, %v540
      %v557 = vadd.f32 %v442, %v541
      %v558 = vadd.f32 %v443, %v542
      %v559 = vadd.f32 %v444, %v543
      %v560 = vadd.f32 %v445, %v544
      %v561 = vadd.f32 %v446, %v545
      %v562 = vadd.f32 %v447, %v546
      %v563 = vadd.f32 %v448, %v547
      %s564 = scalar_lea.vmem %s2, 128
      %v565 = vld [vmem:[%s564] sm:$0xff]
      %v566 = vld [vmem:[%s564 + $0x8] sm:$0xff]
      %v567 = vld [vmem:[%s564 + $0x10] sm:$0xff]
      %v568 = vld [vmem:[%s564 + $0x18] sm:$0xff]
      %v569 = vld [vmem:[%s564 + $0x20] sm:$0xff]
      %v570 = vld [vmem:[%s564 + $0x28] sm:$0xff]
      %v571 = vld [vmem:[%s564 + $0x30] sm:$0xff]
      %v572 = vld [vmem:[%s564 + $0x38] sm:$0xff]
      %v573 = vld [vmem:[%s564 + $0x40] sm:$0xff]
      %v574 = vld [vmem:[%s564 + $0x48] sm:$0xff]
      %v575 = vld [vmem:[%s564 + $0x50] sm:$0xff]
      %v576 = vld [vmem:[%s564 + $0x58] sm:$0xff]
      %v577 = vld [vmem:[%s564 + $0x60] sm:$0xff]
      %v578 = vld [vmem:[%s564 + $0x68] sm:$0xff]
      %v579 = vld [vmem:[%s564 + $0x70] sm:$0xff]
      %v580 = vld [vmem:[%s564 + $0x78] sm:$0xff]
      %581 = vmatpush.msra.mxu0 %v398
      %582 = vmatpush.msra.mxu0 %v397
      %583 = vmatpush.msra.mxu0 %v396
      %584 = vmatpush.msra.mxu0 %v395
      %585 = vmatpush.msra.mxu0 %v394
      %586 = vmatpush.msra.mxu0 %v393
      %587 = vmatpush.msra.mxu0 %v392
      %588 = vmatpush.msra.mxu0 %v391
      %589 = vmatpush.msra.mxu0 %v390
      %590 = vmatpush.msra.mxu0 %v389
      %591 = vmatpush.msra.mxu0 %v388
      %592 = vmatpush.msra.mxu0 %v387
      %593 = vmatpush.msra.mxu0 %v386
      %594 = vmatpush.msra.mxu0 %v385
      %595 = vmatpush.msra.mxu0 %v384
      %596 = vmatpush.msra.mxu0 %v383
      %597 = vmatmul.f32.gmra.mxu0 %v565
      %v598 = vpop.f32.mrf.mxu0
      %v599 = vadd.f32 0.0, %v598
      %600 = vmatmul.f32.gmra.mxu0 %v566
      %v601 = vpop.f32.mrf.mxu0
      %v602 = vadd.f32 0.0, %v601
      %603 = vmatmul.f32.gmra.mxu0 %v567
      %v604 = vpop.f32.mrf.mxu0
      %v605 = vadd.f32 0.0, %v604
      %606 = vmatmul.f32.gmra.mxu0 %v568
      %v607 = vpop.f32.mrf.mxu0
      %v608 = vadd.f32 0.0, %v607
      %609 = vmatmul.f32.gmra.mxu0 %v569
      %v610 = vpop.f32.mrf.mxu0
      %v611 = vadd.f32 0.0, %v610
      %612 = vmatmul.f32.gmra.mxu0 %v570
      %v613 = vpop.f32.mrf.mxu0
      %v614 = vadd.f32 0.0, %v613
      %615 = vmatmul.f32.gmra.mxu0 %v571
      %v616 = vpop.f32.mrf.mxu0
      %v617 = vadd.f32 0.0, %v616
      %618 = vmatmul.f32.gmra.mxu0 %v572
      %v619 = vpop.f32.mrf.mxu0
      %v620 = vadd.f32 0.0, %v619
      %621 = vmatmul.f32.gmra.mxu0 %v573
      %v622 = vpop.f32.mrf.mxu0
      %v623 = vadd.f32 0.0, %v622
      %624 = vmatmul.f32.gmra.mxu0 %v574
      %v625 = vpop.f32.mrf.mxu0
      %v626 = vadd.f32 0.0, %v625
      %627 = vmatmul.f32.gmra.mxu0 %v575
      %v628 = vpop.f32.mrf.mxu0
      %v629 = vadd.f32 0.0, %v628
      %630 = vmatmul.f32.gmra.mxu0 %v576
      %v631 = vpop.f32.mrf.mxu0
      %v632 = vadd.f32 0.0, %v631
      %633 = vmatmul.f32.gmra.mxu0 %v577
      %v634 = vpop.f32.mrf.mxu0
      %v635 = vadd.f32 0.0, %v634
      %636 = vmatmul.f32.gmra.mxu0 %v578
      %v637 = vpop.f32.mrf.mxu0
      %v638 = vadd.f32 0.0, %v637
      %639 = vmatmul.f32.gmra.mxu0 %v579
      %v640 = vpop.f32.mrf.mxu0
      %v641 = vadd.f32 0.0, %v640
      %642 = vmatmul.f32.gmra.mxu0 %v580
      %v643 = vpop.f32.mrf.mxu0
      %v644 = vadd.f32 0.0, %v643
      %645 = vdwg.mxu0
      %v646 = vld [vmem:[%s3 + $0x2] sm:$0x1]
      %v647 = vperm.slane %v646, 0
      %v648 = vmul.f32 %v599, %v647
      %v649 = vmul.f32 %v602, %v647
      %v650 = vmul.f32 %v605, %v647
      %v651 = vmul.f32 %v608, %v647
      %v652 = vmul.f32 %v611, %v647
      %v653 = vmul.f32 %v614, %v647
      %v654 = vmul.f32 %v617, %v647
      %v655 = vmul.f32 %v620, %v647
      %v656 = vmul.f32 %v623, %v647
      %v657 = vmul.f32 %v626, %v647
      %v658 = vmul.f32 %v629, %v647
      %v659 = vmul.f32 %v632, %v647
      %v660 = vmul.f32 %v635, %v647
      %v661 = vmul.f32 %v638, %v647
      %v662 = vmul.f32 %v641, %v647
      %v663 = vmul.f32 %v644, %v647
      %v664 = vadd.f32 %v548, %v648
      %v665 = vadd.f32 %v549, %v649
      %v666 = vadd.f32 %v550, %v650
      %v667 = vadd.f32 %v551, %v651
      %v668 = vadd.f32 %v552, %v652
      %v669 = vadd.f32 %v553, %v653
      %v670 = vadd.f32 %v554, %v654
      %v671 = vadd.f32 %v555, %v655
      %v672 = vadd.f32 %v556, %v656
      %v673 = vadd.f32 %v557, %v657
      %v674 = vadd.f32 %v558, %v658
      %v675 = vadd.f32 %v559, %v659
      %v676 = vadd.f32 %v560, %v660
      %v677 = vadd.f32 %v561, %v661
      %v678 = vadd.f32 %v562, %v662
      %v679 = vadd.f32 %v563, %v663
      %v680 = vmax.f32 %v664, 0.0
      %v681 = vmax.f32 %v665, 0.0
      %v682 = vmax.f32 %v666, 0.0
      %v683 = vmax.f32 %v667, 0.0
      %v684 = vmax.f32 %v668, 0.0
      %v685 = vmax.f32 %v669, 0.0
      %v686 = vmax.f32 %v670, 0.0
      %v687 = vmax.f32 %v671, 0.0
      %v688 = vmax.f32 %v672, 0.0
      %v689 = vmax.f32 %v673, 0.0
      %v690 = vmax.f32 %v674, 0.0
      %v691 = vmax.f32 %v675, 0.0
      %v692 = vmax.f32 %v676, 0.0
      %v693 = vmax.f32 %v677, 0.0
      %v694 = vmax.f32 %v678, 0.0
      %v695 = vmax.f32 %v679, 0.0
      %s696 = scalar_lea.vmem %s1, 128
      %v697 = vld [vmem:[%s696] sm:$0xff]
      %v698 = vld [vmem:[%s696 + $0x8] sm:$0xff]
      %v699 = vld [vmem:[%s696 + $0x10] sm:$0xff]
      %v700 = vld [vmem:[%s696 + $0x18] sm:$0xff]
      %v701 = vld [vmem:[%s696 + $0x20] sm:$0xff]
      %v702 = vld [vmem:[%s696 + $0x28] sm:$0xff]
      %v703 = vld [vmem:[%s696 + $0x30] sm:$0xff]
      %v704 = vld [vmem:[%s696 + $0x38] sm:$0xff]
      %v705 = vld [vmem:[%s696 + $0x40] sm:$0xff]
      %v706 = vld [vmem:[%s696 + $0x48] sm:$0xff]
      %v707 = vld [vmem:[%s696 + $0x50] sm:$0xff]
      %v708 = vld [vmem:[%s696 + $0x58] sm:$0xff]
      %v709 = vld [vmem:[%s696 + $0x60] sm:$0xff]
      %v710 = vld [vmem:[%s696 + $0x68] sm:$0xff]
      %v711 = vld [vmem:[%s696 + $0x70] sm:$0xff]
      %v712 = vld [vmem:[%s696 + $0x78] sm:$0xff]
      %v713 = vld [vmem:[%s4 + $0x1] sm:$0x1]
      %v714 = vperm.slane %v713, 0
      %715 = vmatpush.msra.mxu0 %v712
      %716 = vmatpush.msra.mxu0 %v711
      %717 = vmatpush.msra.mxu0 %v710
      %718 = vmatpush.msra.mxu0 %v709
      %719 = vmatpush.msra.mxu0 %v708
      %720 = vmatpush.msra.mxu0 %v707
      %721 = vmatpush.msra.mxu0 %v706
      %722 = vmatpush.msra.mxu0 %v705
      %723 = vmatpush.msra.mxu0 %v704
      %724 = vmatpush.msra.mxu0 %v703
      %725 = vmatpush.msra.mxu0 %v702
      %726 = vmatpush.msra.mxu0 %v701
      %727 = vmatpush.msra.mxu0 %v700
      %728 = vmatpush.msra.mxu0 %v699
      %729 = vmatpush.msra.mxu0 %v698
      %730 = vmatpush.msra.mxu0 %v697
      %731 = vmatmul.f32.gmra.mxu0 %v680
      %v732 = vpop.f32.mrf.mxu0
      %v733 = vadd.f32 %v714, %v732
      %734 = vmatmul.f32.gmra.mxu0 %v681
      %v735 = vpop.f32.mrf.mxu0
      %v736 = vadd.f32 %v714, %v735
      %737 = vmatmul.f32.gmra.mxu0 %v682
      %v738 = vpop.f32.mrf.mxu0
      %v739 = vadd.f32 %v714, %v738
      %740 = vmatmul.f32.gmra.mxu0 %v683
      %v741 = vpop.f32.mrf.mxu0
      %v742 = vadd.f32 %v714, %v741
      %743 = vmatmul.f32.gmra.mxu0 %v684
      %v744 = vpop.f32.mrf.mxu0
      %v745 = vadd.f32 %v714, %v744
      %746 = vmatmul.f32.gmra.mxu0 %v685
      %v747 = vpop.f32.mrf.mxu0
      %v748 = vadd.f32 %v714, %v747
      %749 = vmatmul.f32.gmra.mxu0 %v686
      %v750 = vpop.f32.mrf.mxu0
      %v751 = vadd.f32 %v714, %v750
      %752 = vmatmul.f32.gmra.mxu0 %v687
      %v753 = vpop.f32.mrf.mxu0
      %v754 = vadd.f32 %v714, %v753
      %755 = vmatmul.f32.gmra.mxu0 %v688
      %v756 = vpop.f32.mrf.mxu0
      %v757 = vadd.f32 %v714, %v756
      %758 = vmatmul.f32.gmra.mxu0 %v689
      %v759 = vpop.f32.mrf.mxu0
      %v760 = vadd.f32 %v714, %v759
      %761 = vmatmul.f32.gmra.mxu0 %v690
      %v762 = vpop.f32.mrf.mxu0
      %v763 = vadd.f32 %v714, %v762
      %764 = vmatmul.f32.gmra.mxu0 %v691
      %v765 = vpop.f32.mrf.mxu0
      %v766 = vadd.f32 %v714, %v765
      %767 = vmatmul.f32.gmra.mxu0 %v692
      %v768 = vpop.f32.mrf.mxu0
      %v769 = vadd.f32 %v714, %v768
      %770 = vmatmul.f32.gmra.mxu0 %v693
      %v771 = vpop.f32.mrf.mxu0
      %v772 = vadd.f32 %v714, %v771
      %773 = vmatmul.f32.gmra.mxu0 %v694
      %v774 = vpop.f32.mrf.mxu0
      %v775 = vadd.f32 %v714, %v774
      %776 = vmatmul.f32.gmra.mxu0 %v695
      %v777 = vpop.f32.mrf.mxu0
      %v778 = vadd.f32 %v714, %v777
      %779 = vdwg.mxu0
      %v780 = vmax.f32 %v733, 0.0
      %v781 = vmax.f32 %v736, 0.0
      %v782 = vmax.f32 %v739, 0.0
      %v783 = vmax.f32 %v742, 0.0
      %v784 = vmax.f32 %v745, 0.0
      %v785 = vmax.f32 %v748, 0.0
      %v786 = vmax.f32 %v751, 0.0
      %v787 = vmax.f32 %v754, 0.0
      %v788 = vmax.f32 %v757, 0.0
      %v789 = vmax.f32 %v760, 0.0
      %v790 = vmax.f32 %v763, 0.0
      %v791 = vmax.f32 %v766, 0.0
      %v792 = vmax.f32 %v769, 0.0
      %v793 = vmax.f32 %v772, 0.0
      %v794 = vmax.f32 %v775, 0.0
      %v795 = vmax.f32 %v778, 0.0
      %s796 = scalar_lea.vmem %s5, 128
      %v797 = vld [vmem:[%s796] sm:$0xff]
      %v798 = vld [vmem:[%s796 + $0x8] sm:$0xff]
      %v799 = vld [vmem:[%s796 + $0x10] sm:$0xff]
      %v800 = vld [vmem:[%s796 + $0x18] sm:$0xff]
      %v801 = vld [vmem:[%s796 + $0x20] sm:$0xff]
      %v802 = vld [vmem:[%s796 + $0x28] sm:$0xff]
      %v803 = vld [vmem:[%s796 + $0x30] sm:$0xff]
      %v804 = vld [vmem:[%s796 + $0x38] sm:$0xff]
      %v805 = vld [vmem:[%s796 + $0x40] sm:$0xff]
      %v806 = vld [vmem:[%s796 + $0x48] sm:$0xff]
      %v807 = vld [vmem:[%s796 + $0x50] sm:$0xff]
      %v808 = vld [vmem:[%s796 + $0x58] sm:$0xff]
      %v809 = vld [vmem:[%s796 + $0x60] sm:$0xff]
      %v810 = vld [vmem:[%s796 + $0x68] sm:$0xff]
      %v811 = vld [vmem:[%s796 + $0x70] sm:$0xff]
      %v812 = vld [vmem:[%s796 + $0x78] sm:$0xff]
      %v813 = vld [vmem:[%s3 + $0x4] sm:$0x1]
      %v814 = vperm.slane %v813, 0
      %v815 = vmul.f32 %v780, %v814
      %v816 = vmul.f32 %v781, %v814
      %v817 = vmul.f32 %v782, %v814
      %v818 = vmul.f32 %v783, %v814
      %v819 = vmul.f32 %v784, %v814
      %v820 = vmul.f32 %v785, %v814
      %v821 = vmul.f32 %v786, %v814
      %v822 = vmul.f32 %v787, %v814
      %v823 = vmul.f32 %v788, %v814
      %v824 = vmul.f32 %v789, %v814
      %v825 = vmul.f32 %v790, %v814
      %v826 = vmul.f32 %v791, %v814
      %v827 = vmul.f32 %v792, %v814
      %v828 = vmul.f32 %v793, %v814
      %v829 = vmul.f32 %v794, %v814
      %v830 = vmul.f32 %v795, %v814
      %v831 = vadd.f32 %v797, %v815
      %v832 = vadd.f32 %v798, %v816
      %v833 = vadd.f32 %v799, %v817
      %v834 = vadd.f32 %v800, %v818
      %v835 = vadd.f32 %v801, %v819
      %v836 = vadd.f32 %v802, %v820
      %v837 = vadd.f32 %v803, %v821
      %v838 = vadd.f32 %v804, %v822
      %v839 = vadd.f32 %v805, %v823
      %v840 = vadd.f32 %v806, %v824
      %v841 = vadd.f32 %v807, %v825
      %v842 = vadd.f32 %v808, %v826
      %v843 = vadd.f32 %v809, %v827
      %v844 = vadd.f32 %v810, %v828
      %v845 = vadd.f32 %v811, %v829
      %v846 = vadd.f32 %v812, %v830
      %s847 = scalar_lea.vmem %s2, 256
      %v848 = vld [vmem:[%s847] sm:$0xff]
      %v849 = vld [vmem:[%s847 + $0x8] sm:$0xff]
      %v850 = vld [vmem:[%s847 + $0x10] sm:$0xff]
      %v851 = vld [vmem:[%s847 + $0x18] sm:$0xff]
      %v852 = vld [vmem:[%s847 + $0x20] sm:$0xff]
      %v853 = vld [vmem:[%s847 + $0x28] sm:$0xff]
      %v854 = vld [vmem:[%s847 + $0x30] sm:$0xff]
      %v855 = vld [vmem:[%s847 + $0x38] sm:$0xff]
      %v856 = vld [vmem:[%s847 + $0x40] sm:$0xff]
      %v857 = vld [vmem:[%s847 + $0x48] sm:$0xff]
      %v858 = vld [vmem:[%s847 + $0x50] sm:$0xff]
      %v859 = vld [vmem:[%s847 + $0x58] sm:$0xff]
      %v860 = vld [vmem:[%s847 + $0x60] sm:$0xff]
      %v861 = vld [vmem:[%s847 + $0x68] sm:$0xff]
      %v862 = vld [vmem:[%s847 + $0x70] sm:$0xff]
      %v863 = vld [vmem:[%s847 + $0x78] sm:$0xff]
      %864 = vmatpush.msra.mxu0 %v795
      %865 = vmatpush.msra.mxu0 %v794
      %866 = vmatpush.msra.mxu0 %v793
      %867 = vmatpush.msra.mxu0 %v792
      %868 = vmatpush.msra.mxu0 %v791
      %869 = vmatpush.msra.mxu0 %v790
      %870 = vmatpush.msra.mxu0 %v789
      %871 = vmatpush.msra.mxu0 %v788
      %872 = vmatpush.msra.mxu0 %v787
      %873 = vmatpush.msra.mxu0 %v786
      %874 = vmatpush.msra.mxu0 %v785
      %875 = vmatpush.msra.mxu0 %v784
      %876 = vmatpush.msra.mxu0 %v783
      %877 = vmatpush.msra.mxu0 %v782
      %878 = vmatpush.msra.mxu0 %v781
      %879 = vmatpush.msra.mxu0 %v780
      %880 = vmatmul.f32.gmra.mxu0 %v848
      %v881 = vpop.f32.mrf.mxu0
      %v882 = vadd.f32 0.0, %v881
      %883 = vmatmul.f32.gmra.mxu0 %v849
      %v884 = vpop.f32.mrf.mxu0
      %v885 = vadd.f32 0.0, %v884
      %886 = vmatmul.f32.gmra.mxu0 %v850
      %v887 = vpop.f32.mrf.mxu0
      %v888 = vadd.f32 0.0, %v887
      %889 = vmatmul.f32.gmra.mxu0 %v851
      %v890 = vpop.f32.mrf.mxu0
      %v891 = vadd.f32 0.0, %v890
      %892 = vmatmul.f32.gmra.mxu0 %v852
      %v893 = vpop.f32.mrf.mxu0
      %v894 = vadd.f32 0.0, %v893
      %895 = vmatmul.f32.gmra.mxu0 %v853
      %v896 = vpop.f32.mrf.mxu0
      %v897 = vadd.f32 0.0, %v896
      %898 = vmatmul.f32.gmra.mxu0 %v854
      %v899 = vpop.f32.mrf.mxu0
      %v900 = vadd.f32 0.0, %v899
      %901 = vmatmul.f32.gmra.mxu0 %v855
      %v902 = vpop.f32.mrf.mxu0
      %v903 = vadd.f32 0.0, %v902
      %904 = vmatmul.f32.gmra.mxu0 %v856
      %v905 = vpop.f32.mrf.mxu0
      %v906 = vadd.f32 0.0, %v905
      %907 = vmatmul.f32.gmra.mxu0 %v857
      %v908 = vpop.f32.mrf.mxu0
      %v909 = vadd.f32 0.0, %v908
      %910 = vmatmul.f32.gmra.mxu0 %v858
      %v911 = vpop.f32.mrf.mxu0
      %v912 = vadd.f32 0.0, %v911
      %913 = vmatmul.f32.gmra.mxu0 %v859
      %v914 = vpop.f32.mrf.mxu0
      %v915 = vadd.f32 0.0, %v914
      %916 = vmatmul.f32.gmra.mxu0 %v860
      %v917 = vpop.f32.mrf.mxu0
      %v918 = vadd.f32 0.0, %v917
      %919 = vmatmul.f32.gmra.mxu0 %v861
      %v920 = vpop.f32.mrf.mxu0
      %v921 = vadd.f32 0.0, %v920
      %922 = vmatmul.f32.gmra.mxu0 %v862
      %v923 = vpop.f32.mrf.mxu0
      %v924 = vadd.f32 0.0, %v923
      %925 = vmatmul.f32.gmra.mxu0 %v863
      %v926 = vpop.f32.mrf.mxu0
      %v927 = vadd.f32 0.0, %v926
      %928 = vdwg.mxu0
      %v929 = vld [vmem:[%s3 + $0x3] sm:$0x1]
      %v930 = vperm.slane %v929, 0
      %v931 = vmul.f32 %v882, %v930
      %v932 = vmul.f32 %v885, %v930
      %v933 = vmul.f32 %v888, %v930
      %v934 = vmul.f32 %v891, %v930
      %v935 = vmul.f32 %v894, %v930
      %v936 = vmul.f32 %v897, %v930
      %v937 = vmul.f32 %v900, %v930
      %v938 = vmul.f32 %v903, %v930
      %v939 = vmul.f32 %v906, %v930
      %v940 = vmul.f32 %v909, %v930
      %v941 = vmul.f32 %v912, %v930
      %v942 = vmul.f32 %v915, %v930
      %v943 = vmul.f32 %v918, %v930
      %v944 = vmul.f32 %v921, %v930
      %v945 = vmul.f32 %v924, %v930
      %v946 = vmul.f32 %v927, %v930
      %v947 = vadd.f32 %v831, %v931
      %v948 = vadd.f32 %v832, %v932
      %v949 = vadd.f32 %v833, %v933
      %v950 = vadd.f32 %v834, %v934
      %v951 = vadd.f32 %v835, %v935
      %v952 = vadd.f32 %v836, %v936
      %v953 = vadd.f32 %v837, %v937
      %v954 = vadd.f32 %v838, %v938
      %v955 = vadd.f32 %v839, %v939
      %v956 = vadd.f32 %v840, %v940
      %v957 = vadd.f32 %v841, %v941
      %v958 = vadd.f32 %v842, %v942
      %v959 = vadd.f32 %v843, %v943
      %v960 = vadd.f32 %v844, %v944
      %v961 = vadd.f32 %v845, %v945
      %v962 = vadd.f32 %v846, %v946
      %s963 = scalar_lea.vmem %s2, 384
      %v964 = vld [vmem:[%s963] sm:$0xff]
      %v965 = vld [vmem:[%s963 + $0x8] sm:$0xff]
      %v966 = vld [vmem:[%s963 + $0x10] sm:$0xff]
      %v967 = vld [vmem:[%s963 + $0x18] sm:$0xff]
      %v968 = vld [vmem:[%s963 + $0x20] sm:$0xff]
      %v969 = vld [vmem:[%s963 + $0x28] sm:$0xff]
      %v970 = vld [vmem:[%s963 + $0x30] sm:$0xff]
      %v971 = vld [vmem:[%s963 + $0x38] sm:$0xff]
      %v972 = vld [vmem:[%s963 + $0x40] sm:$0xff]
      %v973 = vld [vmem:[%s963 + $0x48] sm:$0xff]
      %v974 = vld [vmem:[%s963 + $0x50] sm:$0xff]
      %v975 = vld [vmem:[%s963 + $0x58] sm:$0xff]
      %v976 = vld [vmem:[%s963 + $0x60] sm:$0xff]
      %v977 = vld [vmem:[%s963 + $0x68] sm:$0xff]
      %v978 = vld [vmem:[%s963 + $0x70] sm:$0xff]
      %v979 = vld [vmem:[%s963 + $0x78] sm:$0xff]
      %980 = vmatpush.msra.mxu0 %v795
      %981 = vmatpush.msra.mxu0 %v794
      %982 = vmatpush.msra.mxu0 %v793
      %983 = vmatpush.msra.mxu0 %v792
      %984 = vmatpush.msra.mxu0 %v791
      %985 = vmatpush.msra.mxu0 %v790
      %986 = vmatpush.msra.mxu0 %v789
      %987 = vmatpush.msra.mxu0 %v788
      %988 = vmatpush.msra.mxu0 %v787
      %989 = vmatpush.msra.mxu0 %v786
      %990 = vmatpush.msra.mxu0 %v785
      %991 = vmatpush.msra.mxu0 %v784
      %992 = vmatpush.msra.mxu0 %v783
      %993 = vmatpush.msra.mxu0 %v782
      %994 = vmatpush.msra.mxu0 %v781
      %995 = vmatpush.msra.mxu0 %v780
      %996 = vmatmul.f32.gmra.mxu0 %v964
      %v997 = vpop.f32.mrf.mxu0
      %v998 = vadd.f32 0.0, %v997
      %999 = vmatmul.f32.gmra.mxu0 %v965
      %v1000 = vpop.f32.mrf.mxu0
      %v1001 = vadd.f32 0.0, %v1000
      %1002 = vmatmul.f32.gmra.mxu0 %v966
      %v1003 = vpop.f32.mrf.mxu0
      %v1004 = vadd.f32 0.0, %v1003
      %1005 = vmatmul.f32.gmra.mxu0 %v967
      %v1006 = vpop.f32.mrf.mxu0
      %v1007 = vadd.f32 0.0, %v1006
      %1008 = vmatmul.f32.gmra.mxu0 %v968
      %v1009 = vpop.f32.mrf.mxu0
      %v1010 = vadd.f32 0.0, %v1009
      %1011 = vmatmul.f32.gmra.mxu0 %v969
      %v1012 = vpop.f32.mrf.mxu0
      %v1013 = vadd.f32 0.0, %v1012
      %1014 = vmatmul.f32.gmra.mxu0 %v970
      %v1015 = vpop.f32.mrf.mxu0
      %v1016 = vadd.f32 0.0, %v1015
      %1017 = vmatmul.f32.gmra.mxu0 %v971
      %v1018 = vpop.f32.mrf.mxu0
      %v1019 = vadd.f32 0.0, %v1018
      %1020 = vmatmul.f32.gmra.mxu0 %v972
      %v1021 = vpop.f32.mrf.mxu0
      %v1022 = vadd.f32 0.0, %v1021
      %1023 = vmatmul.f32.gmra.mxu0 %v973
      %v1024 = vpop.f32.mrf.mxu0
      %v1025 = vadd.f32 0.0, %v1024
      %1026 = vmatmul.f32.gmra.mxu0 %v974
      %v1027 = vpop.f32.mrf.mxu0
      %v1028 = vadd.f32 0.0, %v1027
      %1029 = vmatmul.f32.gmra.mxu0 %v975
      %v1030 = vpop.f32.mrf.mxu0
      %v1031 = vadd.f32 0.0, %v1030
      %1032 = vmatmul.f32.gmra.mxu0 %v976
      %v1033 = vpop.f32.mrf.mxu0
      %v1034 = vadd.f32 0.0, %v1033
      %1035 = vmatmul.f32.gmra.mxu0 %v977
      %v1036 = vpop.f32.mrf.mxu0
      %v1037 = vadd.f32 0.0, %v1036
      %1038 = vmatmul.f32.gmra.mxu0 %v978
      %v1039 = vpop.f32.mrf.mxu0
      %v1040 = vadd.f32 0.0, %v1039
      %1041 = vmatmul.f32.gmra.mxu0 %v979
      %v1042 = vpop.f32.mrf.mxu0
      %v1043 = vadd.f32 0.0, %v1042
      %1044 = vdwg.mxu0
      %v1045 = vld [vmem:[%s3 + $0x5] sm:$0x1]
      %v1046 = vperm.slane %v1045, 0
      %v1047 = vmul.f32 %v998, %v1046
      %v1048 = vmul.f32 %v1001, %v1046
      %v1049 = vmul.f32 %v1004, %v1046
      %v1050 = vmul.f32 %v1007, %v1046
      %v1051 = vmul.f32 %v1010, %v1046
      %v1052 = vmul.f32 %v1013, %v1046
      %v1053 = vmul.f32 %v1016, %v1046
      %v1054 = vmul.f32 %v1019, %v1046
      %v1055 = vmul.f32 %v1022, %v1046
      %v1056 = vmul.f32 %v1025, %v1046
      %v1057 = vmul.f32 %v1028, %v1046
      %v1058 = vmul.f32 %v1031, %v1046
      %v1059 = vmul.f32 %v1034, %v1046
      %v1060 = vmul.f32 %v1037, %v1046
      %v1061 = vmul.f32 %v1040, %v1046
      %v1062 = vmul.f32 %v1043, %v1046
      %v1063 = vadd.f32 %v947, %v1047
      %v1064 = vadd.f32 %v948, %v1048
      %v1065 = vadd.f32 %v949, %v1049
      %v1066 = vadd.f32 %v950, %v1050
      %v1067 = vadd.f32 %v951, %v1051
      %v1068 = vadd.f32 %v952, %v1052
      %v1069 = vadd.f32 %v953, %v1053
      %v1070 = vadd.f32 %v954, %v1054
      %v1071 = vadd.f32 %v955, %v1055
      %v1072 = vadd.f32 %v956, %v1056
      %v1073 = vadd.f32 %v957, %v1057
      %v1074 = vadd.f32 %v958, %v1058
      %v1075 = vadd.f32 %v959, %v1059
      %v1076 = vadd.f32 %v960, %v1060
      %v1077 = vadd.f32 %v961, %v1061
      %v1078 = vadd.f32 %v962, %v1062
      %v1079 = vmax.f32 %v1063, 0.0
      %v1080 = vmax.f32 %v1064, 0.0
      %v1081 = vmax.f32 %v1065, 0.0
      %v1082 = vmax.f32 %v1066, 0.0
      %v1083 = vmax.f32 %v1067, 0.0
      %v1084 = vmax.f32 %v1068, 0.0
      %v1085 = vmax.f32 %v1069, 0.0
      %v1086 = vmax.f32 %v1070, 0.0
      %v1087 = vmax.f32 %v1071, 0.0
      %v1088 = vmax.f32 %v1072, 0.0
      %v1089 = vmax.f32 %v1073, 0.0
      %v1090 = vmax.f32 %v1074, 0.0
      %v1091 = vmax.f32 %v1075, 0.0
      %v1092 = vmax.f32 %v1076, 0.0
      %v1093 = vmax.f32 %v1077, 0.0
      %v1094 = vmax.f32 %v1078, 0.0
      %s1095 = scalar_lea.vmem %s1, 256
      %v1096 = vld [vmem:[%s1095] sm:$0xff]
      %v1097 = vld [vmem:[%s1095 + $0x8] sm:$0xff]
      %v1098 = vld [vmem:[%s1095 + $0x10] sm:$0xff]
      %v1099 = vld [vmem:[%s1095 + $0x18] sm:$0xff]
      %v1100 = vld [vmem:[%s1095 + $0x20] sm:$0xff]
      %v1101 = vld [vmem:[%s1095 + $0x28] sm:$0xff]
      %v1102 = vld [vmem:[%s1095 + $0x30] sm:$0xff]
      %v1103 = vld [vmem:[%s1095 + $0x38] sm:$0xff]
      %v1104 = vld [vmem:[%s1095 + $0x40] sm:$0xff]
      %v1105 = vld [vmem:[%s1095 + $0x48] sm:$0xff]
      %v1106 = vld [vmem:[%s1095 + $0x50] sm:$0xff]
      %v1107 = vld [vmem:[%s1095 + $0x58] sm:$0xff]
      %v1108 = vld [vmem:[%s1095 + $0x60] sm:$0xff]
      %v1109 = vld [vmem:[%s1095 + $0x68] sm:$0xff]
      %v1110 = vld [vmem:[%s1095 + $0x70] sm:$0xff]
      %v1111 = vld [vmem:[%s1095 + $0x78] sm:$0xff]
      %v1112 = vld [vmem:[%s4 + $0x2] sm:$0x1]
      %v1113 = vperm.slane %v1112, 0
      %1114 = vmatpush.msra.mxu0 %v1111
      %1115 = vmatpush.msra.mxu0 %v1110
      %1116 = vmatpush.msra.mxu0 %v1109
      %1117 = vmatpush.msra.mxu0 %v1108
      %1118 = vmatpush.msra.mxu0 %v1107
      %1119 = vmatpush.msra.mxu0 %v1106
      %1120 = vmatpush.msra.mxu0 %v1105
      %1121 = vmatpush.msra.mxu0 %v1104
      %1122 = vmatpush.msra.mxu0 %v1103
      %1123 = vmatpush.msra.mxu0 %v1102
      %1124 = vmatpush.msra.mxu0 %v1101
      %1125 = vmatpush.msra.mxu0 %v1100
      %1126 = vmatpush.msra.mxu0 %v1099
      %1127 = vmatpush.msra.mxu0 %v1098
      %1128 = vmatpush.msra.mxu0 %v1097
      %1129 = vmatpush.msra.mxu0 %v1096
      %1130 = vmatmul.f32.gmra.mxu0 %v1079
      %v1131 = vpop.f32.mrf.mxu0
      %v1132 = vadd.f32 %v1113, %v1131
      %1133 = vmatmul.f32.gmra.mxu0 %v1080
      %v1134 = vpop.f32.mrf.mxu0
      %v1135 = vadd.f32 %v1113, %v1134
      %1136 = vmatmul.f32.gmra.mxu0 %v1081
      %v1137 = vpop.f32.mrf.mxu0
      %v1138 = vadd.f32 %v1113, %v1137
      %1139 = vmatmul.f32.gmra.mxu0 %v1082
      %v1140 = vpop.f32.mrf.mxu0
      %v1141 = vadd.f32 %v1113, %v1140
      %1142 = vmatmul.f32.gmra.mxu0 %v1083
      %v1143 = vpop.f32.mrf.mxu0
      %v1144 = vadd.f32 %v1113, %v1143
      %1145 = vmatmul.f32.gmra.mxu0 %v1084
      %v1146 = vpop.f32.mrf.mxu0
      %v1147 = vadd.f32 %v1113, %v1146
      %1148 = vmatmul.f32.gmra.mxu0 %v1085
      %v1149 = vpop.f32.mrf.mxu0
      %v1150 = vadd.f32 %v1113, %v1149
      %1151 = vmatmul.f32.gmra.mxu0 %v1086
      %v1152 = vpop.f32.mrf.mxu0
      %v1153 = vadd.f32 %v1113, %v1152
      %1154 = vmatmul.f32.gmra.mxu0 %v1087
      %v1155 = vpop.f32.mrf.mxu0
      %v1156 = vadd.f32 %v1113, %v1155
      %1157 = vmatmul.f32.gmra.mxu0 %v1088
      %v1158 = vpop.f32.mrf.mxu0
      %v1159 = vadd.f32 %v1113, %v1158
      %1160 = vmatmul.f32.gmra.mxu0 %v1089
      %v1161 = vpop.f32.mrf.mxu0
      %v1162 = vadd.f32 %v1113, %v1161
      %1163 = vmatmul.f32.gmra.mxu0 %v1090
      %v1164 = vpop.f32.mrf.mxu0
      %v1165 = vadd.f32 %v1113, %v1164
      %1166 = vmatmul.f32.gmra.mxu0 %v1091
      %v1167 = vpop.f32.mrf.mxu0
      %v1168 = vadd.f32 %v1113, %v1167
      %1169 = vmatmul.f32.gmra.mxu0 %v1092
      %v1170 = vpop.f32.mrf.mxu0
      %v1171 = vadd.f32 %v1113, %v1170
      %1172 = vmatmul.f32.gmra.mxu0 %v1093
      %v1173 = vpop.f32.mrf.mxu0
      %v1174 = vadd.f32 %v1113, %v1173
      %1175 = vmatmul.f32.gmra.mxu0 %v1094
      %v1176 = vpop.f32.mrf.mxu0
      %v1177 = vadd.f32 %v1113, %v1176
      %1178 = vdwg.mxu0
      %v1179 = vmax.f32 %v1132, 0.0
      %v1180 = vmax.f32 %v1135, 0.0
      %v1181 = vmax.f32 %v1138, 0.0
      %v1182 = vmax.f32 %v1141, 0.0
      %v1183 = vmax.f32 %v1144, 0.0
      %v1184 = vmax.f32 %v1147, 0.0
      %v1185 = vmax.f32 %v1150, 0.0
      %v1186 = vmax.f32 %v1153, 0.0
      %v1187 = vmax.f32 %v1156, 0.0
      %v1188 = vmax.f32 %v1159, 0.0
      %v1189 = vmax.f32 %v1162, 0.0
      %v1190 = vmax.f32 %v1165, 0.0
      %v1191 = vmax.f32 %v1168, 0.0
      %v1192 = vmax.f32 %v1171, 0.0
      %v1193 = vmax.f32 %v1174, 0.0
      %v1194 = vmax.f32 %v1177, 0.0
      %v1195 = vperm.slane %v298, 0
      %v1196 = vmul.f32 %v1179, %v1195
      %v1197 = vmul.f32 %v1180, %v1195
      %v1198 = vmul.f32 %v1181, %v1195
      %v1199 = vmul.f32 %v1182, %v1195
      %v1200 = vmul.f32 %v1183, %v1195
      %v1201 = vmul.f32 %v1184, %v1195
      %v1202 = vmul.f32 %v1185, %v1195
      %v1203 = vmul.f32 %v1186, %v1195
      %v1204 = vmul.f32 %v1187, %v1195
      %v1205 = vmul.f32 %v1188, %v1195
      %v1206 = vmul.f32 %v1189, %v1195
      %v1207 = vmul.f32 %v1190, %v1195
      %v1208 = vmul.f32 %v1191, %v1195
      %v1209 = vmul.f32 %v1192, %v1195
      %v1210 = vmul.f32 %v1193, %v1195
      %v1211 = vmul.f32 %v1194, %v1195
      %v1212 = vperm.slane %v299, 0
      %v1213 = vadd.f32 %v1196, %v1212
      %v1214 = vadd.f32 %v1197, %v1212
      %v1215 = vadd.f32 %v1198, %v1212
      %v1216 = vadd.f32 %v1199, %v1212
      %v1217 = vadd.f32 %v1200, %v1212
      %v1218 = vadd.f32 %v1201, %v1212
      %v1219 = vadd.f32 %v1202, %v1212
      %v1220 = vadd.f32 %v1203, %v1212
      %v1221 = vadd.f32 %v1204, %v1212
      %v1222 = vadd.f32 %v1205, %v1212
      %v1223 = vadd.f32 %v1206, %v1212
      %v1224 = vadd.f32 %v1207, %v1212
      %v1225 = vadd.f32 %v1208, %v1212
      %v1226 = vadd.f32 %v1209, %v1212
      %v1227 = vadd.f32 %v1210, %v1212
      %v1228 = vadd.f32 %v1211, %v1212
      %v1229 = vmul.f32 %v282, %v1213
      %v1230 = vmul.f32 %v283, %v1214
      %v1231 = vmul.f32 %v284, %v1215
      %v1232 = vmul.f32 %v285, %v1216
      %v1233 = vmul.f32 %v286, %v1217
      %v1234 = vmul.f32 %v287, %v1218
      %v1235 = vmul.f32 %v288, %v1219
      %v1236 = vmul.f32 %v289, %v1220
      %v1237 = vmul.f32 %v290, %v1221
      %v1238 = vmul.f32 %v291, %v1222
      %v1239 = vmul.f32 %v292, %v1223
      %v1240 = vmul.f32 %v293, %v1224
      %v1241 = vmul.f32 %v294, %v1225
      %v1242 = vmul.f32 %v295, %v1226
      %v1243 = vmul.f32 %v296, %v1227
      %v1244 = vmul.f32 %v297, %v1228
      %v1245 = vmax.f32 %v1229, 0.0
      %v1246 = vmax.f32 %v1230, 0.0
      %v1247 = vmax.f32 %v1231, 0.0
      %v1248 = vmax.f32 %v1232, 0.0
      %v1249 = vmax.f32 %v1233, 0.0
      %v1250 = vmax.f32 %v1234, 0.0
      %v1251 = vmax.f32 %v1235, 0.0
      %v1252 = vmax.f32 %v1236, 0.0
      %v1253 = vmax.f32 %v1237, 0.0
      %v1254 = vmax.f32 %v1238, 0.0
      %v1255 = vmax.f32 %v1239, 0.0
      %v1256 = vmax.f32 %v1240, 0.0
      %v1257 = vmax.f32 %v1241, 0.0
      %v1258 = vmax.f32 %v1242, 0.0
      %v1259 = vmax.f32 %v1243, 0.0
      %v1260 = vmax.f32 %v1244, 0.0
      %v1261 = vmul.f32 %v1245, %v1195
      %v1262 = vmul.f32 %v1246, %v1195
      %v1263 = vmul.f32 %v1247, %v1195
      %v1264 = vmul.f32 %v1248, %v1195
      %v1265 = vmul.f32 %v1249, %v1195
      %v1266 = vmul.f32 %v1250, %v1195
      %v1267 = vmul.f32 %v1251, %v1195
      %v1268 = vmul.f32 %v1252, %v1195
      %v1269 = vmul.f32 %v1253, %v1195
      %v1270 = vmul.f32 %v1254, %v1195
      %v1271 = vmul.f32 %v1255, %v1195
      %v1272 = vmul.f32 %v1256, %v1195
      %v1273 = vmul.f32 %v1257, %v1195
      %v1274 = vmul.f32 %v1258, %v1195
      %v1275 = vmul.f32 %v1259, %v1195
      %v1276 = vmul.f32 %v1260, %v1195
      %v1277 = vadd.f32 %v1261, %v1212
      %v1278 = vadd.f32 %v1262, %v1212
      %v1279 = vadd.f32 %v1263, %v1212
      %v1280 = vadd.f32 %v1264, %v1212
      %v1281 = vadd.f32 %v1265, %v1212
      %v1282 = vadd.f32 %v1266, %v1212
      %v1283 = vadd.f32 %v1267, %v1212
      %v1284 = vadd.f32 %v1268, %v1212
      %v1285 = vadd.f32 %v1269, %v1212
      %v1286 = vadd.f32 %v1270, %v1212
      %v1287 = vadd.f32 %v1271, %v1212
      %v1288 = vadd.f32 %v1272, %v1212
      %v1289 = vadd.f32 %v1273, %v1212
      %v1290 = vadd.f32 %v1274, %v1212
      %v1291 = vadd.f32 %v1275, %v1212
      %v1292 = vadd.f32 %v1276, %v1212
      %1293 = vst [vmem:[%s280] sm:$0xff] %v1277
      %1294 = vst [vmem:[%s280 + $0x8] sm:$0xff] %v1278
      %1295 = vst [vmem:[%s280 + $0x10] sm:$0xff] %v1279
      %1296 = vst [vmem:[%s280 + $0x18] sm:$0xff] %v1280
      %1297 = vst [vmem:[%s280 + $0x20] sm:$0xff] %v1281
      %1298 = vst [vmem:[%s280 + $0x28] sm:$0xff] %v1282
      %1299 = vst [vmem:[%s280 + $0x30] sm:$0xff] %v1283
      %1300 = vst [vmem:[%s280 + $0x38] sm:$0xff] %v1284
      %1301 = vst [vmem:[%s280 + $0x40] sm:$0xff] %v1285
      %1302 = vst [vmem:[%s280 + $0x48] sm:$0xff] %v1286
      %1303 = vst [vmem:[%s280 + $0x50] sm:$0xff] %v1287
      %1304 = vst [vmem:[%s280 + $0x58] sm:$0xff] %v1288
      %1305 = vst [vmem:[%s280 + $0x60] sm:$0xff] %v1289
      %1306 = vst [vmem:[%s280 + $0x68] sm:$0xff] %v1290
      %1307 = vst [vmem:[%s280 + $0x70] sm:$0xff] %v1291
      %1308 = vst [vmem:[%s280 + $0x78] sm:$0xff] %v1292
      %s1309 = smul.u32 16, %s18
      %p1310 = scmp.lt.s32.totalorder %s1309, 31
      %s1311 = scalar_select %p1310, %s1309, 31
      %s1312 = smul.addr %s1311, 8
      %s1313 = scalar_lea.vmem %s7, %s1312
      // Predicated region
      $region49: #{lska7_forward.1} parent=47 // pred_check
        %p1314 = pneg %p188
      $region50: #{lska7_forward.1} parent=47 // pred_check_branch
        %1316 = sbr.rel (%p1314) target = $region52
      $region51: #{lska7_forward.1} parent=47 // pred_region
        %s1317 = smul.u32 16, %s18
      $region52: #{lska7_forward.1} parent=47 // pred_fallthru
        _
    $region48: #{lska7_forward.1} parent=5 // pred_fallthru
      _
    %p1318 = scmp.le.s32.totalorder 2, %s13
    // Predicated region
    $region53: #{lska7_forward.1} parent=5 // pred_check
      %p1319 = pneg %p1318
    $region54: #{lska7_forward.1} parent=5 // pred_check_branch
      %1321 = sbr.rel (%p1319) target = $region56
    $region55: #{lska7_forward.1} parent=5 // pred_region
      %s1322 = ssub.s32 %s13, 2
      // Predicated region
      $region57: #{lska7_forward.1} parent=55 // pred_check
        %p1323 = pneg %p194
      $region58: #{lska7_forward.1} parent=55 // pred_check_branch
        %1325 = sbr.rel (%p1323) target = $region60
      $region59: #{lska7_forward.1} parent=55 // pred_region
        %s1326 = smul.u32 16, %s19
        %p1327 = scmp.lt.s32.totalorder %s1326, 31
        %s1328 = scalar_select %p1327, %s1326, 31
        %s1329 = smul.addr %s1328, 8
        %s1330 = scalar_lea.vmem %s7, %s1329
      $region60: #{lska7_forward.1} parent=55 // pred_fallthru
        _
    $region56: #{lska7_forward.1} parent=5 // pred_fallthru
      _
  $region6: #{lska7_forward.1} parent=0 // loop_footer
    %s17 = sadd.s32 1, %s13
  $region7: #{lska7_forward.1} parent=0 // loop_footer_branch
    %12 = sbr.rel target = $region3
  $region8: #{lska7_forward.1} parent=0 // loop_exit
    _

</llo_original>
